<compile_context>
chip_gen: v7x
topology: tpu7x:2x2x1
jax: 0.10.0
libtpu: 0.0.40
codegen_flags: <defaults>
</compile_context>

<pallas_src>
import jax
import jax.numpy as jnp
from jax.experimental import pallas as pl
from jax.experimental.pallas import tpu as pltpu


def _round_up(x, m):
    return ((x + m - 1) // m) * m


def _gather_kernel(lo_ref, nb_ref, keep_ref, edge_ref, out_ref):
    """Gather one tile of TK kept-edge columns out of the resident edge array.

    lo_ref  : (n_tiles,) int32 SMEM   first edge block touched by this K tile
    nb_ref  : (n_tiles,) int32 SMEM   number of edge blocks touched by this tile
    keep_ref: (TK, 1)    int32 VMEM   kept-edge indices (sorted asc., padded
                                      with the last valid index)
    edge_ref: (2, NB, TE) int32 VMEM  resident copy of the padded edge_index
    out_ref : (TK, 2)    int32 VMEM   gathered edge endpoints for this tile
    """
    i = pl.program_id(0)
    tk = keep_ref.shape[0]
    te = edge_ref.shape[2]

    keep_col = keep_ref[...]                       # (TK, 1) int32
    b0 = lo_ref[i]                                 # first edge block to scan
    n_blocks = nb_ref[i]                           # how many blocks to scan

    # Loop-invariant local column ids (review item 4: the big iota stays out of
    # the loop; the per-block offset is applied to the tiny keep column).
    local_ids = jax.lax.broadcasted_iota(jnp.int32, (tk, te), 1)

    def body(t, carry):
        acc0, acc1 = carry                         # each (TK, 1) int32
        blk = b0 + t
        e = edge_ref[:, blk, :]                    # (2, TE) int32
        # match[k, c]  <=>  keep[k] == blk * TE + c        (exact int32)
        match = local_ids == (keep_col - blk * te)           # (TK, TE) bool
        # At most one column matches each kept index, so a masked lane-sum
        # recovers edge_index[:, keep[k]] exactly (no f32 / 2**24 ceiling).
        acc0 = acc0 + jnp.sum(jnp.where(match, e[0:1, :], 0),
                              axis=1, keepdims=True)
        acc1 = acc1 + jnp.sum(jnp.where(match, e[1:2, :], 0),
                              axis=1, keepdims=True)
        return acc0, acc1

    zeros = jnp.zeros((tk, 1), jnp.int32)
    acc0, acc1 = jax.lax.fori_loop(0, n_blocks, body, (zeros, zeros))

    out_ref[:, 0:1] = acc0
    out_ref[:, 1:2] = acc1


def _gather_columns_sorted(edge_index, keep_sorted, *, tk=256, te=512):
    """edge_index[:, keep_sorted] via the windowed Pallas gather.

    keep_sorted must be sorted ascending (enforced by the caller).  Correctness
    does not depend on sortedness (per-tile min/max windows are used), but
    sortedness is what keeps each K tile's edge window small, i.e. the O(K)-ish
    behavior.
    """
    _, E = edge_index.shape
    K = int(keep_sorted.shape[0])
    assert K >= 1

    k_pad = _round_up(K, tk)
    n_eblk = int(pl.cdiv(E, te))
    e_pad = n_eblk * te
    n_tiles = k_pad // tk

    # Pad kept indices with the last (largest) valid index: padded rows gather
    # real data that gets sliced off below, and the last tile's block window
    # stays tight and in-bounds.
    keep_p = jnp.full((k_pad,), keep_sorted[K - 1], dtype=jnp.int32)
    keep_p = keep_p.at[:K].set(keep_sorted.astype(jnp.int32))
    keep_col = keep_p.reshape(k_pad, 1)

    # Resident edge layout (2, NB, TE): the size-2 axis is outermost so the last
    # two dims tile densely in VMEM; zero padded past E (never matched, since
    # every keep index is < E).
    edge_p = jnp.zeros((2, e_pad), dtype=jnp.int32).at[:, :E].set(
        edge_index.astype(jnp.int32))
    edge_blocks = edge_p.reshape(2, n_eblk, te)

    # Per-K-tile edge-block windows -> scalar prefetch (SMEM).
    tiles = keep_p.reshape(n_tiles, tk)
    lo_blk = (jnp.min(tiles, axis=1) // te).astype(jnp.int32)
    hi_blk = (jnp.max(tiles, axis=1) // te).astype(jnp.int32)
    nb_blk = (hi_blk - lo_blk + 1).astype(jnp.int32)

    # Resident edges are double-buffered by the pipeline: 2 * 8 * E_pad bytes.
    # (v7x note: chunk the resident block beyond ~3M edges -- see module TODO.)
    vmem_limit = int(max(32 * 1024 * 1024, 16 * e_pad + 8 * 1024 * 1024))

    out = pl.pallas_call(
        _gather_kernel,
        out_shape=jax.ShapeDtypeStruct((k_pad, 2), jnp.int32),
        grid_spec=pltpu.PrefetchScalarGridSpec(
            num_scalar_prefetch=2,
            grid=(n_tiles,),
            in_specs=[
                # kept indices: one (TK, 1) block per grid step
                pl.BlockSpec((tk, 1), lambda i, lo, nb: (i, 0)),
                # edge_index: constant block index -> DMA'd from HBM once
                # (per TensorCore) and kept VMEM-resident across all K tiles.
                pl.BlockSpec((2, n_eblk, te), lambda i, lo, nb: (0, 0, 0)),
            ],
            out_specs=pl.BlockSpec((tk, 2), lambda i, lo, nb: (i, 0)),
        ),
        compiler_params=pltpu.CompilerParams(
            dimension_semantics=("parallel",),  # megacore-shard K tiles (v7x)
            vmem_limit_bytes=vmem_limit,
        ),
    )(lo_blk, nb_blk, keep_col, edge_blocks)

    return out[:K, :].T  # (2, K)


def edge_perturb(x, edge_index, aug_ratio, key):
    """JAX/Pallas equivalent of EdgePerturb(data, aug_ratio)."""
    N, _ = x.shape
    _, E = edge_index.shape
    P = int(E * aug_ratio)          # permute_num
    K = E - P                       # kept edges

    k_keep, k_add = jax.random.split(key)
    # torch.ones(E).multinomial(K, replacement=False) == uniformly random
    # K-subset.  Same subset distribution here, listed ascending (sortedness is
    # what makes the Pallas gather windowed/cheap; ordering of kept columns is
    # immaterial and torch's RNG stream is not reproducible anyway).
    keep_idx = jnp.sort(jax.random.permutation(k_keep, E)[:K]).astype(jnp.int32)
    # torch.ones(2, node_num).multinomial(P, replacement=True) -> uniform ids
    add_edges = jax.random.randint(k_add, (2, P), 0, N, dtype=jnp.int32)

    if K == 0:
        # Degenerate case (aug_ratio >= 1): no kernel work, all edges replaced.
        new_edge_index = add_edges
    else:
        kept = _gather_columns_sorted(edge_index, keep_idx)
        # add_edges are a pure pass-through; appended outside the kernel.
        new_edge_index = jnp.concatenate([kept, add_edges], axis=1)

    # x is untouched by EdgePerturb (deepcopy semantics -> return a copy).
    return jnp.array(x), new_edge_index, keep_idx, add_edges


class GraphAugmentorPallas:
    """Mirrors Graph_Augmentor: if aug_ratio > 0, forward forces aug=1 (EdgePerturb)."""

    def __init__(self, aug_ratio, preset=-1):
        self.aug_ratio = aug_ratio
        self.aug = preset

    def __call__(self, x, edge_index, key):
        if self.aug_ratio > 0:
            self.aug = 1  # matches the PyTorch forward, which overwrites self.aug
            return edge_perturb(x, edge_index, self.aug_ratio, key)
        # TODO(synk): NodeDrop / AttrMask branches are dead code in the reference
        # forward (aug is always reset to 1); not implemented.
        return x, edge_index, None, None


if __name__ == "__main__":
    key = jax.random.PRNGKey(0)

    def check(N, F, E, aug_ratio, case_key):
        k_x, k_e, k_aug = jax.random.split(case_key, 3)
        x = jax.random.normal(k_x, (N, F), dtype=jnp.float32)
        edge_index = jax.random.randint(k_e, (2, E), 0, N, dtype=jnp.int32)

        aug = GraphAugmentorPallas(aug_ratio)
        x_out, new_edge_index, keep_idx, add_edges = aug(x, edge_index, k_aug)
        jax.block_until_ready(new_edge_index)

        # Reference (plain JAX): gather + concat.
        ref = jnp.concatenate([edge_index[:, keep_idx], add_edges], axis=1)
        assert new_edge_index.shape == (2, E)
        assert bool(jnp.all(new_edge_index == ref))
        assert bool(jnp.all(x_out == x))

    k1, k2 = jax.random.split(key)
    # Small graph (single K tile, single edge block).
    check(N=16, F=8, E=32, aug_ratio=0.25, case_key=k1)
    # Non-aligned graph exercising multiple K tiles and edge blocks.
    check(N=1000, F=4, E=1537, aug_ratio=0.3, case_key=k2)

    print("KERNEL_OK")
</pallas_src>

<mosaic_0001>
module attributes {stable_mosaic.version = 11 : i64} {
  func.func @_gather_kernel(%arg0: i32, %arg1: memref<1xi32, #tpu.memory_space<smem>>, %arg2: memref<1xi32, #tpu.memory_space<smem>>, %arg3: memref<256x1xi32, #tpu.memory_space<vmem>>, %arg4: memref<2x1x512xi32, #tpu.memory_space<vmem>>, %arg5: memref<256x2xi32, #tpu.memory_space<vmem>>) attributes {dimension_semantics = [#tpu.dimension_semantics<parallel>], iteration_bounds = array<i64: 1>, scalar_prefetch = 2 : i64, scratch_operands = 0 : i64, tpu.core_type = #tpu.core_type<tc>, window_params = [{transform_indices = @transform_0, window_bounds = array<i64: 256, 1>}, {pipeline_mode = #tpu.pipeline_mode<synchronous>, transform_indices = @transform_1, window_bounds = array<i64: 2, 1, 512>}, {transform_indices = @transform_2, window_bounds = array<i64: 256, 2>}]} {
    %c0 = arith.constant 0 : index
    %c0_0 = arith.constant 0 : index
    %0 = vector.load %arg3[%c0, %c0_0] : memref<256x1xi32, #tpu.memory_space<vmem>>, vector<256x1xi32>
    %1 = arith.index_cast %arg0 : i32 to index
    %2 = memref.load %arg1[%1] : memref<1xi32, #tpu.memory_space<smem>>
    %3 = arith.index_cast %arg0 : i32 to index
    %4 = memref.load %arg2[%3] : memref<1xi32, #tpu.memory_space<smem>>
    %5 = tpu.iota {dimensions = array<i32: 1>} : vector<256x512xi32>
    %c0_i32 = arith.constant 0 : i32
    %6 = vector.broadcast %c0_i32 : i32 to vector<256x1xi32>
    %c0_i32_1 = arith.constant 0 : i32
    %7 = arith.subi %4, %c0_i32_1 : i32
    %8 = arith.addi %c0_i32_1, %7 : i32
    %c1_i32 = arith.constant 1 : i32
    %9:2 = scf.for %arg6 = %c0_i32_1 to %8 step %c1_i32 iter_args(%arg7 = %6, %arg8 = %6) -> (vector<256x1xi32>, vector<256x1xi32>)  : i32 {
      %12 = arith.addi %2, %arg6 : i32
      %c0_5 = arith.constant 0 : index
      %13 = arith.index_cast %12 : i32 to index
      %c0_6 = arith.constant 0 : index
      %14 = vector.load %arg4[%c0_5, %13, %c0_6] : memref<2x1x512xi32, #tpu.memory_space<vmem>>, vector<2x1x512xi32>
      %15 = vector.shape_cast %14 : vector<2x1x512xi32> to vector<2x512xi32>
      %c512_i32 = arith.constant 512 : i32
      %16 = arith.muli %12, %c512_i32 : i32
      %17 = vector.broadcast %16 : i32 to vector<256x1xi32>
      %18 = arith.subi %0, %17 : vector<256x1xi32>
      %19 = vector.broadcast %18 : vector<256x1xi32> to vector<256x512xi32>
      %20 = arith.cmpi eq, %5, %19 : vector<256x512xi32>
      %21 = vector.extract_strided_slice %15 {offsets = [0, 0], sizes = [1, 512], strides = [1, 1]} : vector<2x512xi32> to vector<1x512xi32>
      %c0_i32_7 = arith.constant 0 : i32
      %22 = vector.shape_cast %21 : vector<1x512xi32> to vector<1x512xi32>
      %23 = vector.broadcast %22 : vector<1x512xi32> to vector<256x512xi32>
      %24 = vector.broadcast %c0_i32_7 : i32 to vector<256x512xi32>
      %25 = arith.select %20, %23, %24 : vector<256x512xi1>, vector<256x512xi32>
      %cst = arith.constant dense<0> : vector<256xi32>
      %26 = vector.multi_reduction <add>, %25, %cst [1] : vector<256x512xi32> to vector<256xi32>
      %27 = vector.shape_cast %26 : vector<256xi32> to vector<256x1xi32>
      %28 = arith.addi %arg7, %27 : vector<256x1xi32>
      %29 = vector.extract_strided_slice %15 {offsets = [1, 0], sizes = [1, 512], strides = [1, 1]} : vector<2x512xi32> to vector<1x512xi32>
      %c0_i32_8 = arith.constant 0 : i32
      %30 = vector.shape_cast %29 : vector<1x512xi32> to vector<1x512xi32>
      %31 = vector.broadcast %30 : vector<1x512xi32> to vector<256x512xi32>
      %32 = vector.broadcast %c0_i32_8 : i32 to vector<256x512xi32>
      %33 = arith.select %20, %31, %32 : vector<256x512xi1>, vector<256x512xi32>
      %cst_9 = arith.constant dense<0> : vector<256xi32>
      %34 = vector.multi_reduction <add>, %33, %cst_9 [1] : vector<256x512xi32> to vector<256xi32>
      %35 = vector.shape_cast %34 : vector<256xi32> to vector<256x1xi32>
      %36 = arith.addi %arg8, %35 : vector<256x1xi32>
      scf.yield %28, %36 : vector<256x1xi32>, vector<256x1xi32>
    }
    %c0_2 = arith.constant 0 : index
    %c0_3 = arith.constant 0 : index
    %10 = vector.load %arg5[%c0_2, %c0_3] : memref<256x2xi32, #tpu.memory_space<vmem>>, vector<256x1xi32>
    tpu.vector_store %arg5[%c0_2, %c0_3], %9#0 {strides = array<i32>} : memref<256x2xi32, #tpu.memory_space<vmem>>, vector<256x1xi32>,
    %c0_4 = arith.constant 0 : index
    %c1 = arith.constant 1 : index
    %11 = vector.load %arg5[%c0_4, %c1] : memref<256x2xi32, #tpu.memory_space<vmem>>, vector<256x1xi32>
    tpu.vector_store %arg5[%c0_4, %c1], %9#1 {strides = array<i32>} : memref<256x2xi32, #tpu.memory_space<vmem>>, vector<256x1xi32>,
    return
  }
  func.func @transform_0(%arg0: i32, %arg1: memref<1xi32, #tpu.memory_space<smem>>, %arg2: memref<1xi32, #tpu.memory_space<smem>>) -> (i32, i32) {
    %c0_i32 = arith.constant 0 : i32
    %c0_i32_0 = arith.constant 0 : i32
    return %arg0, %c0_i32 : i32, i32
  }
  func.func @transform_1(%arg0: i32, %arg1: memref<1xi32, #tpu.memory_space<smem>>, %arg2: memref<1xi32, #tpu.memory_space<smem>>) -> (i32, i32, i32) {
    %c0_i32 = arith.constant 0 : i32
    %c0_i32_0 = arith.constant 0 : i32
    %c0_i32_1 = arith.constant 0 : i32
    %c0_i32_2 = arith.constant 0 : i32
    return %c0_i32, %c0_i32_0, %c0_i32_1 : i32, i32, i32
  }
  func.func @transform_2(%arg0: i32, %arg1: memref<1xi32, #tpu.memory_space<smem>>, %arg2: memref<1xi32, #tpu.memory_space<smem>>) -> (i32, i32) {
    %c0_i32 = arith.constant 0 : i32
    %c0_i32_0 = arith.constant 0 : i32
    return %arg0, %c0_i32 : i32, i32
  }
}

</mosaic_0001>

<llo_original>
// kernel: tpu_custom_call.1
$region0: #{tpu_custom_call.1}
  #allocation0 [shape = 'u32[]', space=smem, size = 0x4, offset = 0x4, fixed_abs, tag = 'smem constant byte address 0x4 - core index']
  #allocation1 [shape = 'u32[144,128]{1,0:T(1,128)}', space=vmem, size = 0x12000, scoped, tag = 'internal scratch']
  #allocation2 [shape = 's32[1]{0}', space=sflag, size = 0x4, scoped, tag = 'scoped memory for tpu_custom_call.1']
  #allocation3 [shape = 's32[1]{0:T(128)S(6)}', space=smem, size = 0x200, scoped, tag = 'prefetched SMEM operand 0']
  #allocation4 [shape = 's32[1]{0:T(128)S(6)}', space=smem, size = 0x200, scoped, tag = 'prefetched SMEM operand 1']
  %s0 = inlined_call_operand.<no memory space> [shape: s32[1], index: 0, kind: input, shape index: {}]
  %s1 = inlined_call_operand.<no memory space> [shape: s32[1], index: 1, kind: input, shape index: {}]
  %s2 = inlined_call_operand.vmem [shape: s32[256,1], index: 2, kind: input, shape index: {}]
  %s3 = inlined_call_operand.vmem [shape: s32[2,1,512], index: 3, kind: input, shape index: {}]
  %s4 = inlined_call_operand.vmem [shape: s32[256,2], index: 4, kind: output, shape index: {}]
  %s5 = sld [smem:[#allocation0]]
  $region25: #{tpu_custom_call.1} parent=0
    _
  %s7 = ssub.s32 1, %s5
  %s8 = scalar_select 0, %s7, %s5
  %9 = sst [smem:[#allocation3]] %s0
  %10 = sst [smem:[#allocation4]] %s1
  // Predicated region
  $region2: #{tpu_custom_call.1} parent=0 // pred_check
    _
  $region3: #{tpu_custom_call.1} parent=0 // pred_check_branch
    %12 = sbr.rel (0) target = $region5
  $region4: #{tpu_custom_call.1} parent=0 // pred_region
    _
  $region5: #{tpu_custom_call.1} parent=0 // pred_fallthru
    _
  // Predicated region
  $region6: #{tpu_custom_call.1} parent=0 // pred_check
    _
  $region7: #{tpu_custom_call.1} parent=0 // pred_check_branch
    %14 = sbr.rel (0) target = $region9
  $region8: #{tpu_custom_call.1} parent=0 // pred_region
    _
  $region9: #{tpu_custom_call.1} parent=0 // pred_fallthru
    _
  %v15 = vld [vmem:[%s2] sm:$0xff]
  %v16 = vld [vmem:[%s2 + $0x8] sm:$0xff]
  %v17 = vld [vmem:[%s2 + $0x10] sm:$0xff]
  %v18 = vld [vmem:[%s2 + $0x18] sm:$0xff]
  %v19 = vld [vmem:[%s2 + $0x20] sm:$0xff]
  %v20 = vld [vmem:[%s2 + $0x28] sm:$0xff]
  %v21 = vld [vmem:[%s2 + $0x30] sm:$0xff]
  %v22 = vld [vmem:[%s2 + $0x38] sm:$0xff]
  %v23 = vld [vmem:[%s2 + $0x40] sm:$0xff]
  %v24 = vld [vmem:[%s2 + $0x48] sm:$0xff]
  %v25 = vld [vmem:[%s2 + $0x50] sm:$0xff]
  %v26 = vld [vmem:[%s2 + $0x58] sm:$0xff]
  %v27 = vld [vmem:[%s2 + $0x60] sm:$0xff]
  %v28 = vld [vmem:[%s2 + $0x68] sm:$0xff]
  %v29 = vld [vmem:[%s2 + $0x70] sm:$0xff]
  %v30 = vld [vmem:[%s2 + $0x78] sm:$0xff]
  %v31 = vld [vmem:[%s2 + $0x80] sm:$0xff]
  %v32 = vld [vmem:[%s2 + $0x88] sm:$0xff]
  %v33 = vld [vmem:[%s2 + $0x90] sm:$0xff]
  %v34 = vld [vmem:[%s2 + $0x98] sm:$0xff]
  %v35 = vld [vmem:[%s2 + $0xa0] sm:$0xff]
  %v36 = vld [vmem:[%s2 + $0xa8] sm:$0xff]
  %v37 = vld [vmem:[%s2 + $0xb0] sm:$0xff]
  %v38 = vld [vmem:[%s2 + $0xb8] sm:$0xff]
  %v39 = vld [vmem:[%s2 + $0xc0] sm:$0xff]
  %v40 = vld [vmem:[%s2 + $0xc8] sm:$0xff]
  %v41 = vld [vmem:[%s2 + $0xd0] sm:$0xff]
  %v42 = vld [vmem:[%s2 + $0xd8] sm:$0xff]
  %v43 = vld [vmem:[%s2 + $0xe0] sm:$0xff]
  %v44 = vld [vmem:[%s2 + $0xe8] sm:$0xff]
  %v45 = vld [vmem:[%s2 + $0xf0] sm:$0xff]
  %v46 = vld [vmem:[%s2 + $0xf8] sm:$0xff]
  %s47 = sld [smem:[#allocation3]]
  %s48 = sld [smem:[#allocation4]]
  %v49 = vlaneseq
  %v50 = vand.u32 %v49, 127
  %v51 = vadd.s32 %v50, 128
  %v52 = vadd.s32 %v50, 256
  %v53 = vadd.s32 %v50, 384
  // While loop
  $region10: #{tpu_custom_call.1} parent=0 // loop_pre_header
    _
  $region11: #{tpu_custom_call.1} parent=0 // loop_header
    %s55 = sphi 0, %s57
    %p56 = scmp.ge.s32.totalorder %s55, %s48
    %v60 = vphi 0, %v1011
    %v61 = vphi 0, %v1012
    %v62 = vphi 0, %v1013
    %v63 = vphi 0, %v1014
    %v64 = vphi 0, %v1015
    %v65 = vphi 0, %v1016
    %v66 = vphi 0, %v1017
    %v67 = vphi 0, %v1018
    %v68 = vphi 0, %v1019
    %v69 = vphi 0, %v1020
    %v70 = vphi 0, %v1021
    %v71 = vphi 0, %v1022
    %v72 = vphi 0, %v1023
    %v73 = vphi 0, %v1024
    %v74 = vphi 0, %v1025
    %v75 = vphi 0, %v1026
    %v76 = vphi 0, %v1027
    %v77 = vphi 0, %v1028
    %v78 = vphi 0, %v1029
    %v79 = vphi 0, %v1030
    %v80 = vphi 0, %v1031
    %v81 = vphi 0, %v1032
    %v82 = vphi 0, %v1033
    %v83 = vphi 0, %v1034
    %v84 = vphi 0, %v1035
    %v85 = vphi 0, %v1036
    %v86 = vphi 0, %v1037
    %v87 = vphi 0, %v1038
    %v88 = vphi 0, %v1039
    %v89 = vphi 0, %v1040
    %v90 = vphi 0, %v1041
    %v91 = vphi 0, %v1042
    %v92 = vphi 0, %v1667
    %v93 = vphi 0, %v1668
    %v94 = vphi 0, %v1669
    %v95 = vphi 0, %v1670
    %v96 = vphi 0, %v1671
    %v97 = vphi 0, %v1672
    %v98 = vphi 0, %v1673
    %v99 = vphi 0, %v1674
    %v100 = vphi 0, %v1675
    %v101 = vphi 0, %v1676
    %v102 = vphi 0, %v1677
    %v103 = vphi 0, %v1678
    %v104 = vphi 0, %v1679
    %v105 = vphi 0, %v1680
    %v106 = vphi 0, %v1681
    %v107 = vphi 0, %v1682
    %v108 = vphi 0, %v1683
    %v109 = vphi 0, %v1684
    %v110 = vphi 0, %v1685
    %v111 = vphi 0, %v1686
    %v112 = vphi 0, %v1687
    %v113 = vphi 0, %v1688
    %v114 = vphi 0, %v1689
    %v115 = vphi 0, %v1690
    %v116 = vphi 0, %v1691
    %v117 = vphi 0, %v1692
    %v118 = vphi 0, %v1693
    %v119 = vphi 0, %v1694
    %v120 = vphi 0, %v1695
    %v121 = vphi 0, %v1696
    %v122 = vphi 0, %v1697
    %v123 = vphi 0, %v1698
  $region12: #{tpu_custom_call.1} parent=0 // loop_header_branch
    %59 = sbr.rel (%p56) target = $region16
  $region13: #{tpu_custom_call.1} parent=0 // loop_body
    %s124 = sadd.s32 %s47, %s55
    %s125 = smul.u32 %s124, 4
    %s126 = scalar_lea.vmem %s3, %s125
    %v127 = vld [vmem:[%s126] sm:$0xf]
    %v128 = vld [vmem:[%s126 + $0x4] sm:$0xf]
    %s129 = smul.u32 %s124, 512
    %v130 = vstv %s129
    %v131 = vsub.s32 %v15, %v130
    %v132 = vsub.s32 %v16, %v130
    %v133 = vsub.s32 %v17, %v130
    %v134 = vsub.s32 %v18, %v130
    %v135 = vsub.s32 %v19, %v130
    %v136 = vsub.s32 %v20, %v130
    %v137 = vsub.s32 %v21, %v130
    %v138 = vsub.s32 %v22, %v130
    %v139 = vsub.s32 %v23, %v130
    %v140 = vsub.s32 %v24, %v130
    %v141 = vsub.s32 %v25, %v130
    %v142 = vsub.s32 %v26, %v130
    %v143 = vsub.s32 %v27, %v130
    %v144 = vsub.s32 %v28, %v130
    %v145 = vsub.s32 %v29, %v130
    %v146 = vsub.s32 %v30, %v130
    %v147 = vsub.s32 %v31, %v130
    %v148 = vsub.s32 %v32, %v130
    %v149 = vsub.s32 %v33, %v130
    %v150 = vsub.s32 %v34, %v130
    %v151 = vsub.s32 %v35, %v130
    %v152 = vsub.s32 %v36, %v130
    %v153 = vsub.s32 %v37, %v130
    %v154 = vsub.s32 %v38, %v130
    %v155 = vsub.s32 %v39, %v130
    %v156 = vsub.s32 %v40, %v130
    %v157 = vsub.s32 %v41, %v130
    %v158 = vsub.s32 %v42, %v130
    %v159 = vsub.s32 %v43, %v130
    %v160 = vsub.s32 %v44, %v130
    %v161 = vsub.s32 %v45, %v130
    %v162 = vsub.s32 %v46, %v130
    %163 = vset.pattern.permute.xlu0 0
    %164 = vperm.xlu0 %163, %v131
    %v165 = vpop.permute.xlu0 %164
    %166 = vset.pattern.permute.xlu0 0
    %167 = vperm.xlu0 %166, %v132
    %v168 = vpop.permute.xlu0 %167
    %169 = vset.pattern.permute.xlu0 0
    %170 = vperm.xlu0 %169, %v133
    %v171 = vpop.permute.xlu0 %170
    %172 = vset.pattern.permute.xlu0 0
    %173 = vperm.xlu0 %172, %v134
    %v174 = vpop.permute.xlu0 %173
    %175 = vset.pattern.permute.xlu0 0
    %176 = vperm.xlu0 %175, %v135
    %v177 = vpop.permute.xlu0 %176
    %178 = vset.pattern.permute.xlu0 0
    %179 = vperm.xlu0 %178, %v136
    %v180 = vpop.permute.xlu0 %179
    %181 = vset.pattern.permute.xlu0 0
    %182 = vperm.xlu0 %181, %v137
    %v183 = vpop.permute.xlu0 %182
    %184 = vset.pattern.permute.xlu0 0
    %185 = vperm.xlu0 %184, %v138
    %v186 = vpop.permute.xlu0 %185
    %187 = vset.pattern.permute.xlu0 0
    %188 = vperm.xlu0 %187, %v139
    %v189 = vpop.permute.xlu0 %188
    %190 = vset.pattern.permute.xlu0 0
    %191 = vperm.xlu0 %190, %v140
    %v192 = vpop.permute.xlu0 %191
    %193 = vset.pattern.permute.xlu0 0
    %194 = vperm.xlu0 %193, %v141
    %v195 = vpop.permute.xlu0 %194
    %196 = vset.pattern.permute.xlu0 0
    %197 = vperm.xlu0 %196, %v142
    %v198 = vpop.permute.xlu0 %197
    %199 = vset.pattern.permute.xlu0 0
    %200 = vperm.xlu0 %199, %v143
    %v201 = vpop.permute.xlu0 %200
    %202 = vset.pattern.permute.xlu0 0
    %203 = vperm.xlu0 %202, %v144
    %v204 = vpop.permute.xlu0 %203
    %205 = vset.pattern.permute.xlu0 0
    %206 = vperm.xlu0 %205, %v145
    %v207 = vpop.permute.xlu0 %206
    %208 = vset.pattern.permute.xlu0 0
    %209 = vperm.xlu0 %208, %v146
    %v210 = vpop.permute.xlu0 %209
    %211 = vset.pattern.permute.xlu0 0
    %212 = vperm.xlu0 %211, %v147
    %v213 = vpop.permute.xlu0 %212
    %214 = vset.pattern.permute.xlu0 0
    %215 = vperm.xlu0 %214, %v148
    %v216 = vpop.permute.xlu0 %215
    %217 = vset.pattern.permute.xlu0 0
    %218 = vperm.xlu0 %217, %v149
    %v219 = vpop.permute.xlu0 %218
    %220 = vset.pattern.permute.xlu0 0
    %221 = vperm.xlu0 %220, %v150
    %v222 = vpop.permute.xlu0 %221
    %223 = vset.pattern.permute.xlu0 0
    %224 = vperm.xlu0 %223, %v151
    %v225 = vpop.permute.xlu0 %224
    %226 = vset.pattern.permute.xlu0 0
    %227 = vperm.xlu0 %226, %v152
    %v228 = vpop.permute.xlu0 %227
    %229 = vset.pattern.permute.xlu0 0
    %230 = vperm.xlu0 %229, %v153
    %v231 = vpop.permute.xlu0 %230
    %232 = vset.pattern.permute.xlu0 0
    %233 = vperm.xlu0 %232, %v154
    %v234 = vpop.permute.xlu0 %233
    %235 = vset.pattern.permute.xlu0 0
    %236 = vperm.xlu0 %235, %v155
    %v237 = vpop.permute.xlu0 %236
    %238 = vset.pattern.permute.xlu0 0
    %239 = vperm.xlu0 %238, %v156
    %v240 = vpop.permute.xlu0 %239
    %241 = vset.pattern.permute.xlu0 0
    %242 = vperm.xlu0 %241, %v157
    %v243 = vpop.permute.xlu0 %242
    %244 = vset.pattern.permute.xlu0 0
    %245 = vperm.xlu0 %244, %v158
    %v246 = vpop.permute.xlu0 %245
    %247 = vset.pattern.permute.xlu0 0
    %248 = vperm.xlu0 %247, %v159
    %v249 = vpop.permute.xlu0 %248
    %250 = vset.pattern.permute.xlu0 0
    %251 = vperm.xlu0 %250, %v160
    %v252 = vpop.permute.xlu0 %251
    %253 = vset.pattern.permute.xlu0 0
    %254 = vperm.xlu0 %253, %v161
    %v255 = vpop.permute.xlu0 %254
    %256 = vset.pattern.permute.xlu0 0
    %257 = vperm.xlu0 %256, %v162
    %v258 = vpop.permute.xlu0 %257
    %vm259 = vcmp.eq.s32.totalorder %v50, %v165
    %vm260 = vcmp.eq.s32.totalorder %v51, %v165
    %vm261 = vcmp.eq.s32.totalorder %v52, %v165
    %vm262 = vcmp.eq.s32.totalorder %v53, %v165
    %vm263 = vcmp.eq.s32.totalorder %v50, %v168
    %vm264 = vcmp.eq.s32.totalorder %v51, %v168
    %vm265 = vcmp.eq.s32.totalorder %v52, %v168
    %vm266 = vcmp.eq.s32.totalorder %v53, %v168
    %vm267 = vcmp.eq.s32.totalorder %v50, %v171
    %vm268 = vcmp.eq.s32.totalorder %v51, %v171
    %vm269 = vcmp.eq.s32.totalorder %v52, %v171
    %vm270 = vcmp.eq.s32.totalorder %v53, %v171
    %vm271 = vcmp.eq.s32.totalorder %v50, %v174
    %vm272 = vcmp.eq.s32.totalorder %v51, %v174
    %vm273 = vcmp.eq.s32.totalorder %v52, %v174
    %vm274 = vcmp.eq.s32.totalorder %v53, %v174
    %vm275 = vcmp.eq.s32.totalorder %v50, %v177
    %vm276 = vcmp.eq.s32.totalorder %v51, %v177
    %vm277 = vcmp.eq.s32.totalorder %v52, %v177
    %vm278 = vcmp.eq.s32.totalorder %v53, %v177
    %vm279 = vcmp.eq.s32.totalorder %v50, %v180
    %vm280 = vcmp.eq.s32.totalorder %v51, %v180
    %vm281 = vcmp.eq.s32.totalorder %v52, %v180
    %vm282 = vcmp.eq.s32.totalorder %v53, %v180
    %vm283 = vcmp.eq.s32.totalorder %v50, %v183
    %vm284 = vcmp.eq.s32.totalorder %v51, %v183
    %vm285 = vcmp.eq.s32.totalorder %v52, %v183
    %vm286 = vcmp.eq.s32.totalorder %v53, %v183
    %vm287 = vcmp.eq.s32.totalorder %v50, %v186
    %vm288 = vcmp.eq.s32.totalorder %v51, %v186
    %vm289 = vcmp.eq.s32.totalorder %v52, %v186
    %vm290 = vcmp.eq.s32.totalorder %v53, %v186
    %vm291 = vcmp.eq.s32.totalorder %v50, %v189
    %vm292 = vcmp.eq.s32.totalorder %v51, %v189
    %vm293 = vcmp.eq.s32.totalorder %v52, %v189
    %vm294 = vcmp.eq.s32.totalorder %v53, %v189
    %vm295 = vcmp.eq.s32.totalorder %v50, %v192
    %vm296 = vcmp.eq.s32.totalorder %v51, %v192
    %vm297 = vcmp.eq.s32.totalorder %v52, %v192
    %vm298 = vcmp.eq.s32.totalorder %v53, %v192
    %vm299 = vcmp.eq.s32.totalorder %v50, %v195
    %vm300 = vcmp.eq.s32.totalorder %v51, %v195
    %vm301 = vcmp.eq.s32.totalorder %v52, %v195
    %vm302 = vcmp.eq.s32.totalorder %v53, %v195
    %vm303 = vcmp.eq.s32.totalorder %v50, %v198
    %vm304 = vcmp.eq.s32.totalorder %v51, %v198
    %vm305 = vcmp.eq.s32.totalorder %v52, %v198
    %vm306 = vcmp.eq.s32.totalorder %v53, %v198
    %vm307 = vcmp.eq.s32.totalorder %v50, %v201
    %vm308 = vcmp.eq.s32.totalorder %v51, %v201
    %vm309 = vcmp.eq.s32.totalorder %v52, %v201
    %vm310 = vcmp.eq.s32.totalorder %v53, %v201
    %vm311 = vcmp.eq.s32.totalorder %v50, %v204
    %vm312 = vcmp.eq.s32.totalorder %v51, %v204
    %vm313 = vcmp.eq.s32.totalorder %v52, %v204
    %vm314 = vcmp.eq.s32.totalorder %v53, %v204
    %vm315 = vcmp.eq.s32.totalorder %v50, %v207
    %vm316 = vcmp.eq.s32.totalorder %v51, %v207
    %vm317 = vcmp.eq.s32.totalorder %v52, %v207
    %vm318 = vcmp.eq.s32.totalorder %v53, %v207
    %vm319 = vcmp.eq.s32.totalorder %v50, %v210
    %vm320 = vcmp.eq.s32.totalorder %v51, %v210
    %vm321 = vcmp.eq.s32.totalorder %v52, %v210
    %vm322 = vcmp.eq.s32.totalorder %v53, %v210
    %vm323 = vcmp.eq.s32.totalorder %v50, %v213
    %vm324 = vcmp.eq.s32.totalorder %v51, %v213
    %vm325 = vcmp.eq.s32.totalorder %v52, %v213
    %vm326 = vcmp.eq.s32.totalorder %v53, %v213
    %vm327 = vcmp.eq.s32.totalorder %v50, %v216
    %vm328 = vcmp.eq.s32.totalorder %v51, %v216
    %vm329 = vcmp.eq.s32.totalorder %v52, %v216
    %vm330 = vcmp.eq.s32.totalorder %v53, %v216
    %vm331 = vcmp.eq.s32.totalorder %v50, %v219
    %vm332 = vcmp.eq.s32.totalorder %v51, %v219
    %vm333 = vcmp.eq.s32.totalorder %v52, %v219
    %vm334 = vcmp.eq.s32.totalorder %v53, %v219
    %vm335 = vcmp.eq.s32.totalorder %v50, %v222
    %vm336 = vcmp.eq.s32.totalorder %v51, %v222
    %vm337 = vcmp.eq.s32.totalorder %v52, %v222
    %vm338 = vcmp.eq.s32.totalorder %v53, %v222
    %vm339 = vcmp.eq.s32.totalorder %v50, %v225
    %vm340 = vcmp.eq.s32.totalorder %v51, %v225
    %vm341 = vcmp.eq.s32.totalorder %v52, %v225
    %vm342 = vcmp.eq.s32.totalorder %v53, %v225
    %vm343 = vcmp.eq.s32.totalorder %v50, %v228
    %vm344 = vcmp.eq.s32.totalorder %v51, %v228
    %vm345 = vcmp.eq.s32.totalorder %v52, %v228
    %vm346 = vcmp.eq.s32.totalorder %v53, %v228
    %vm347 = vcmp.eq.s32.totalorder %v50, %v231
    %vm348 = vcmp.eq.s32.totalorder %v51, %v231
    %vm349 = vcmp.eq.s32.totalorder %v52, %v231
    %vm350 = vcmp.eq.s32.totalorder %v53, %v231
    %vm351 = vcmp.eq.s32.totalorder %v50, %v234
    %vm352 = vcmp.eq.s32.totalorder %v51, %v234
    %vm353 = vcmp.eq.s32.totalorder %v52, %v234
    %vm354 = vcmp.eq.s32.totalorder %v53, %v234
    %vm355 = vcmp.eq.s32.totalorder %v50, %v237
    %vm356 = vcmp.eq.s32.totalorder %v51, %v237
    %vm357 = vcmp.eq.s32.totalorder %v52, %v237
    %vm358 = vcmp.eq.s32.totalorder %v53, %v237
    %vm359 = vcmp.eq.s32.totalorder %v50, %v240
    %vm360 = vcmp.eq.s32.totalorder %v51, %v240
    %vm361 = vcmp.eq.s32.totalorder %v52, %v240
    %vm362 = vcmp.eq.s32.totalorder %v53, %v240
    %vm363 = vcmp.eq.s32.totalorder %v50, %v243
    %vm364 = vcmp.eq.s32.totalorder %v51, %v243
    %vm365 = vcmp.eq.s32.totalorder %v52, %v243
    %vm366 = vcmp.eq.s32.totalorder %v53, %v243
    %vm367 = vcmp.eq.s32.totalorder %v50, %v246
    %vm368 = vcmp.eq.s32.totalorder %v51, %v246
    %vm369 = vcmp.eq.s32.totalorder %v52, %v246
    %vm370 = vcmp.eq.s32.totalorder %v53, %v246
    %vm371 = vcmp.eq.s32.totalorder %v50, %v249
    %vm372 = vcmp.eq.s32.totalorder %v51, %v249
    %vm373 = vcmp.eq.s32.totalorder %v52, %v249
    %vm374 = vcmp.eq.s32.totalorder %v53, %v249
    %vm375 = vcmp.eq.s32.totalorder %v50, %v252
    %vm376 = vcmp.eq.s32.totalorder %v51, %v252
    %vm377 = vcmp.eq.s32.totalorder %v52, %v252
    %vm378 = vcmp.eq.s32.totalorder %v53, %v252
    %vm379 = vcmp.eq.s32.totalorder %v50, %v255
    %vm380 = vcmp.eq.s32.totalorder %v51, %v255
    %vm381 = vcmp.eq.s32.totalorder %v52, %v255
    %vm382 = vcmp.eq.s32.totalorder %v53, %v255
    %vm383 = vcmp.eq.s32.totalorder %v50, %v258
    %vm384 = vcmp.eq.s32.totalorder %v51, %v258
    %vm385 = vcmp.eq.s32.totalorder %v52, %v258
    %vm386 = vcmp.eq.s32.totalorder %v53, %v258
    %v387 = vlaneseq
    %v388 = vshrl.u32 %v387, 7
    %v389 = vsub.s32 0, %v388
    %v390 = vrot.slane %v127, %v389
    %v391 = vlaneseq
    %v392 = vshrl.u32 %v391, 7
    %v393 = vsub.s32 1, %v392
    %v394 = vrot.slane %v127, %v393
    %v395 = vlaneseq
    %v396 = vshrl.u32 %v395, 7
    %v397 = vsub.s32 2, %v396
    %v398 = vrot.slane %v127, %v397
    %v399 = vlaneseq
    %v400 = vshrl.u32 %v399, 7
    %v401 = vsub.s32 3, %v400
    %v402 = vrot.slane %v127, %v401
    %v403 = vsel %vm259, %v390, 0
    %v404 = vsel %vm260, %v394, 0
    %v405 = vsel %vm261, %v398, 0
    %v406 = vsel %vm262, %v402, 0
    %v407 = vsel %vm263, %v390, 0
    %v408 = vsel %vm264, %v394, 0
    %v409 = vsel %vm265, %v398, 0
    %v410 = vsel %vm266, %v402, 0
    %v411 = vsel %vm267, %v390, 0
    %v412 = vsel %vm268, %v394, 0
    %v413 = vsel %vm269, %v398, 0
    %v414 = vsel %vm270, %v402, 0
    %v415 = vsel %vm271, %v390, 0
    %v416 = vsel %vm272, %v394, 0
    %v417 = vsel %vm273, %v398, 0
    %v418 = vsel %vm274, %v402, 0
    %v419 = vsel %vm275, %v390, 0
    %v420 = vsel %vm276, %v394, 0
    %v421 = vsel %vm277, %v398, 0
    %v422 = vsel %vm278, %v402, 0
    %v423 = vsel %vm279, %v390, 0
    %v424 = vsel %vm280, %v394, 0
    %v425 = vsel %vm281, %v398, 0
    %v426 = vsel %vm282, %v402, 0
    %v427 = vsel %vm283, %v390, 0
    %v428 = vsel %vm284, %v394, 0
    %v429 = vsel %vm285, %v398, 0
    %v430 = vsel %vm286, %v402, 0
    %v431 = vsel %vm287, %v390, 0
    %v432 = vsel %vm288, %v394, 0
    %v433 = vsel %vm289, %v398, 0
    %v434 = vsel %vm290, %v402, 0
    %v435 = vsel %vm291, %v390, 0
    %v436 = vsel %vm292, %v394, 0
    %v437 = vsel %vm293, %v398, 0
    %v438 = vsel %vm294, %v402, 0
    %v439 = vsel %vm295, %v390, 0
    %v440 = vsel %vm296, %v394, 0
    %v441 = vsel %vm297, %v398, 0
    %v442 = vsel %vm298, %v402, 0
    %v443 = vsel %vm299, %v390, 0
    %v444 = vsel %vm300, %v394, 0
    %v445 = vsel %vm301, %v398, 0
    %v446 = vsel %vm302, %v402, 0
    %v447 = vsel %vm303, %v390, 0
    %v448 = vsel %vm304, %v394, 0
    %v449 = vsel %vm305, %v398, 0
    %v450 = vsel %vm306, %v402, 0
    %v451 = vsel %vm307, %v390, 0
    %v452 = vsel %vm308, %v394, 0
    %v453 = vsel %vm309, %v398, 0
    %v454 = vsel %vm310, %v402, 0
    %v455 = vsel %vm311, %v390, 0
    %v456 = vsel %vm312, %v394, 0
    %v457 = vsel %vm313, %v398, 0
    %v458 = vsel %vm314, %v402, 0
    %v459 = vsel %vm315, %v390, 0
    %v460 = vsel %vm316, %v394, 0
    %v461 = vsel %vm317, %v398, 0
    %v462 = vsel %vm318, %v402, 0
    %v463 = vsel %vm319, %v390, 0
    %v464 = vsel %vm320, %v394, 0
    %v465 = vsel %vm321, %v398, 0
    %v466 = vsel %vm322, %v402, 0
    %v467 = vsel %vm323, %v390, 0
    %v468 = vsel %vm324, %v394, 0
    %v469 = vsel %vm325, %v398, 0
    %v470 = vsel %vm326, %v402, 0
    %v471 = vsel %vm327, %v390, 0
    %v472 = vsel %vm328, %v394, 0
    %v473 = vsel %vm329, %v398, 0
    %v474 = vsel %vm330, %v402, 0
    %v475 = vsel %vm331, %v390, 0
    %v476 = vsel %vm332, %v394, 0
    %v477 = vsel %vm333, %v398, 0
    %v478 = vsel %vm334, %v402, 0
    %v479 = vsel %vm335, %v390, 0
    %v480 = vsel %vm336, %v394, 0
    %v481 = vsel %vm337, %v398, 0
    %v482 = vsel %vm338, %v402, 0
    %v483 = vsel %vm339, %v390, 0
    %v484 = vsel %vm340, %v394, 0
    %v485 = vsel %vm341, %v398, 0
    %v486 = vsel %vm342, %v402, 0
    %v487 = vsel %vm343, %v390, 0
    %v488 = vsel %vm344, %v394, 0
    %v489 = vsel %vm345, %v398, 0
    %v490 = vsel %vm346, %v402, 0
    %v491 = vsel %vm347, %v390, 0
    %v492 = vsel %vm348, %v394, 0
    %v493 = vsel %vm349, %v398, 0
    %v494 = vsel %vm350, %v402, 0
    %v495 = vsel %vm351, %v390, 0
    %v496 = vsel %vm352, %v394, 0
    %v497 = vsel %vm353, %v398, 0
    %v498 = vsel %vm354, %v402, 0
    %v499 = vsel %vm355, %v390, 0
    %v500 = vsel %vm356, %v394, 0
    %v501 = vsel %vm357, %v398, 0
    %v502 = vsel %vm358, %v402, 0
    %v503 = vsel %vm359, %v390, 0
    %v504 = vsel %vm360, %v394, 0
    %v505 = vsel %vm361, %v398, 0
    %v506 = vsel %vm362, %v402, 0
    %v507 = vsel %vm363, %v390, 0
    %v508 = vsel %vm364, %v394, 0
    %v509 = vsel %vm365, %v398, 0
    %v510 = vsel %vm366, %v402, 0
    %v511 = vsel %vm367, %v390, 0
    %v512 = vsel %vm368, %v394, 0
    %v513 = vsel %vm369, %v398, 0
    %v514 = vsel %vm370, %v402, 0
    %v515 = vsel %vm371, %v390, 0
    %v516 = vsel %vm372, %v394, 0
    %v517 = vsel %vm373, %v398, 0
    %v518 = vsel %vm374, %v402, 0
    %v519 = vsel %vm375, %v390, 0
    %v520 = vsel %vm376, %v394, 0
    %v521 = vsel %vm377, %v398, 0
    %v522 = vsel %vm378, %v402, 0
    %v523 = vsel %vm379, %v390, 0
    %v524 = vsel %vm380, %v394, 0
    %v525 = vsel %vm381, %v398, 0
    %v526 = vsel %vm382, %v402, 0
    %v527 = vsel %vm383, %v390, 0
    %v528 = vsel %vm384, %v394, 0
    %v529 = vsel %vm385, %v398, 0
    %v530 = vsel %vm386, %v402, 0
    %v531 = vadd.s32 %v403, %v404
    %v532 = vadd.s32 %v531, %v405
    %v533 = vadd.s32 %v532, %v406
    %v534 = vand.u32 %v533, 65535
    %v535 = vshrl.u32 %v533, 16
    %v536 = vcvt.s32.f32 %v534
    %v537 = vcvt.s32.f32 %v535
    %538 = vadd.xlane.f32.xlu0 %v536
    %v539 = vpop.xlane.xlu0 %538
    %540 = vadd.xlane.f32.xlu0 %v537
    %v541 = vpop.xlane.xlu0 %540
    %v542 = vcvt.f32.s32 %v539
    %v543 = vcvt.f32.s32 %v541
    %v544 = vshll.u32 %v543, 16
    %v545 = vadd.s32 %v544, %v542
    %v546 = vadd.s32 %v407, %v408
    %v547 = vadd.s32 %v546, %v409
    %v548 = vadd.s32 %v547, %v410
    %v549 = vand.u32 %v548, 65535
    %v550 = vshrl.u32 %v548, 16
    %v551 = vcvt.s32.f32 %v549
    %v552 = vcvt.s32.f32 %v550
    %553 = vadd.xlane.f32.xlu0 %v551
    %v554 = vpop.xlane.xlu0 %553
    %555 = vadd.xlane.f32.xlu0 %v552
    %v556 = vpop.xlane.xlu0 %555
    %v557 = vcvt.f32.s32 %v554
    %v558 = vcvt.f32.s32 %v556
    %v559 = vshll.u32 %v558, 16
    %v560 = vadd.s32 %v559, %v557
    %v561 = vadd.s32 %v411, %v412
    %v562 = vadd.s32 %v561, %v413
    %v563 = vadd.s32 %v562, %v414
    %v564 = vand.u32 %v563, 65535
    %v565 = vshrl.u32 %v563, 16
    %v566 = vcvt.s32.f32 %v564
    %v567 = vcvt.s32.f32 %v565
    %568 = vadd.xlane.f32.xlu0 %v566
    %v569 = vpop.xlane.xlu0 %568
    %570 = vadd.xlane.f32.xlu0 %v567
    %v571 = vpop.xlane.xlu0 %570
    %v572 = vcvt.f32.s32 %v569
    %v573 = vcvt.f32.s32 %v571
    %v574 = vshll.u32 %v573, 16
    %v575 = vadd.s32 %v574, %v572
    %v576 = vadd.s32 %v415, %v416
    %v577 = vadd.s32 %v576, %v417
    %v578 = vadd.s32 %v577, %v418
    %v579 = vand.u32 %v578, 65535
    %v580 = vshrl.u32 %v578, 16
    %v581 = vcvt.s32.f32 %v579
    %v582 = vcvt.s32.f32 %v580
    %583 = vadd.xlane.f32.xlu0 %v581
    %v584 = vpop.xlane.xlu0 %583
    %585 = vadd.xlane.f32.xlu0 %v582
    %v586 = vpop.xlane.xlu0 %585
    %v587 = vcvt.f32.s32 %v584
    %v588 = vcvt.f32.s32 %v586
    %v589 = vshll.u32 %v588, 16
    %v590 = vadd.s32 %v589, %v587
    %v591 = vadd.s32 %v419, %v420
    %v592 = vadd.s32 %v591, %v421
    %v593 = vadd.s32 %v592, %v422
    %v594 = vand.u32 %v593, 65535
    %v595 = vshrl.u32 %v593, 16
    %v596 = vcvt.s32.f32 %v594
    %v597 = vcvt.s32.f32 %v595
    %598 = vadd.xlane.f32.xlu0 %v596
    %v599 = vpop.xlane.xlu0 %598
    %600 = vadd.xlane.f32.xlu0 %v597
    %v601 = vpop.xlane.xlu0 %600
    %v602 = vcvt.f32.s32 %v599
    %v603 = vcvt.f32.s32 %v601
    %v604 = vshll.u32 %v603, 16
    %v605 = vadd.s32 %v604, %v602
    %v606 = vadd.s32 %v423, %v424
    %v607 = vadd.s32 %v606, %v425
    %v608 = vadd.s32 %v607, %v426
    %v609 = vand.u32 %v608, 65535
    %v610 = vshrl.u32 %v608, 16
    %v611 = vcvt.s32.f32 %v609
    %v612 = vcvt.s32.f32 %v610
    %613 = vadd.xlane.f32.xlu0 %v611
    %v614 = vpop.xlane.xlu0 %613
    %615 = vadd.xlane.f32.xlu0 %v612
    %v616 = vpop.xlane.xlu0 %615
    %v617 = vcvt.f32.s32 %v614
    %v618 = vcvt.f32.s32 %v616
    %v619 = vshll.u32 %v618, 16
    %v620 = vadd.s32 %v619, %v617
    %v621 = vadd.s32 %v427, %v428
    %v622 = vadd.s32 %v621, %v429
    %v623 = vadd.s32 %v622, %v430
    %v624 = vand.u32 %v623, 65535
    %v625 = vshrl.u32 %v623, 16
    %v626 = vcvt.s32.f32 %v624
    %v627 = vcvt.s32.f32 %v625
    %628 = vadd.xlane.f32.xlu0 %v626
    %v629 = vpop.xlane.xlu0 %628
    %630 = vadd.xlane.f32.xlu0 %v627
    %v631 = vpop.xlane.xlu0 %630
    %v632 = vcvt.f32.s32 %v629
    %v633 = vcvt.f32.s32 %v631
    %v634 = vshll.u32 %v633, 16
    %v635 = vadd.s32 %v634, %v632
    %v636 = vadd.s32 %v431, %v432
    %v637 = vadd.s32 %v636, %v433
    %v638 = vadd.s32 %v637, %v434
    %v639 = vand.u32 %v638, 65535
    %v640 = vshrl.u32 %v638, 16
    %v641 = vcvt.s32.f32 %v639
    %v642 = vcvt.s32.f32 %v640
    %643 = vadd.xlane.f32.xlu0 %v641
    %v644 = vpop.xlane.xlu0 %643
    %645 = vadd.xlane.f32.xlu0 %v642
    %v646 = vpop.xlane.xlu0 %645
    %v647 = vcvt.f32.s32 %v644
    %v648 = vcvt.f32.s32 %v646
    %v649 = vshll.u32 %v648, 16
    %v650 = vadd.s32 %v649, %v647
    %v651 = vadd.s32 %v435, %v436
    %v652 = vadd.s32 %v651, %v437
    %v653 = vadd.s32 %v652, %v438
    %v654 = vand.u32 %v653, 65535
    %v655 = vshrl.u32 %v653, 16
    %v656 = vcvt.s32.f32 %v654
    %v657 = vcvt.s32.f32 %v655
    %658 = vadd.xlane.f32.xlu0 %v656
    %v659 = vpop.xlane.xlu0 %658
    %660 = vadd.xlane.f32.xlu0 %v657
    %v661 = vpop.xlane.xlu0 %660
    %v662 = vcvt.f32.s32 %v659
    %v663 = vcvt.f32.s32 %v661
    %v664 = vshll.u32 %v663, 16
    %v665 = vadd.s32 %v664, %v662
    %v666 = vadd.s32 %v439, %v440
    %v667 = vadd.s32 %v666, %v441
    %v668 = vadd.s32 %v667, %v442
    %v669 = vand.u32 %v668, 65535
    %v670 = vshrl.u32 %v668, 16
    %v671 = vcvt.s32.f32 %v669
    %v672 = vcvt.s32.f32 %v670
    %673 = vadd.xlane.f32.xlu0 %v671
    %v674 = vpop.xlane.xlu0 %673
    %675 = vadd.xlane.f32.xlu0 %v672
    %v676 = vpop.xlane.xlu0 %675
    %v677 = vcvt.f32.s32 %v674
    %v678 = vcvt.f32.s32 %v676
    %v679 = vshll.u32 %v678, 16
    %v680 = vadd.s32 %v679, %v677
    %v681 = vadd.s32 %v443, %v444
    %v682 = vadd.s32 %v681, %v445
    %v683 = vadd.s32 %v682, %v446
    %v684 = vand.u32 %v683, 65535
    %v685 = vshrl.u32 %v683, 16
    %v686 = vcvt.s32.f32 %v684
    %v687 = vcvt.s32.f32 %v685
    %688 = vadd.xlane.f32.xlu0 %v686
    %v689 = vpop.xlane.xlu0 %688
    %690 = vadd.xlane.f32.xlu0 %v687
    %v691 = vpop.xlane.xlu0 %690
    %v692 = vcvt.f32.s32 %v689
    %v693 = vcvt.f32.s32 %v691
    %v694 = vshll.u32 %v693, 16
    %v695 = vadd.s32 %v694, %v692
    %v696 = vadd.s32 %v447, %v448
    %v697 = vadd.s32 %v696, %v449
    %v698 = vadd.s32 %v697, %v450
    %v699 = vand.u32 %v698, 65535
    %v700 = vshrl.u32 %v698, 16
    %v701 = vcvt.s32.f32 %v699
    %v702 = vcvt.s32.f32 %v700
    %703 = vadd.xlane.f32.xlu0 %v701
    %v704 = vpop.xlane.xlu0 %703
    %705 = vadd.xlane.f32.xlu0 %v702
    %v706 = vpop.xlane.xlu0 %705
    %v707 = vcvt.f32.s32 %v704
    %v708 = vcvt.f32.s32 %v706
    %v709 = vshll.u32 %v708, 16
    %v710 = vadd.s32 %v709, %v707
    %v711 = vadd.s32 %v451, %v452
    %v712 = vadd.s32 %v711, %v453
    %v713 = vadd.s32 %v712, %v454
    %v714 = vand.u32 %v713, 65535
    %v715 = vshrl.u32 %v713, 16
    %v716 = vcvt.s32.f32 %v714
    %v717 = vcvt.s32.f32 %v715
    %718 = vadd.xlane.f32.xlu0 %v716
    %v719 = vpop.xlane.xlu0 %718
    %720 = vadd.xlane.f32.xlu0 %v717
    %v721 = vpop.xlane.xlu0 %720
    %v722 = vcvt.f32.s32 %v719
    %v723 = vcvt.f32.s32 %v721
    %v724 = vshll.u32 %v723, 16
    %v725 = vadd.s32 %v724, %v722
    %v726 = vadd.s32 %v455, %v456
    %v727 = vadd.s32 %v726, %v457
    %v728 = vadd.s32 %v727, %v458
    %v729 = vand.u32 %v728, 65535
    %v730 = vshrl.u32 %v728, 16
    %v731 = vcvt.s32.f32 %v729
    %v732 = vcvt.s32.f32 %v730
    %733 = vadd.xlane.f32.xlu0 %v731
    %v734 = vpop.xlane.xlu0 %733
    %735 = vadd.xlane.f32.xlu0 %v732
    %v736 = vpop.xlane.xlu0 %735
    %v737 = vcvt.f32.s32 %v734
    %v738 = vcvt.f32.s32 %v736
    %v739 = vshll.u32 %v738, 16
    %v740 = vadd.s32 %v739, %v737
    %v741 = vadd.s32 %v459, %v460
    %v742 = vadd.s32 %v741, %v461
    %v743 = vadd.s32 %v742, %v462
    %v744 = vand.u32 %v743, 65535
    %v745 = vshrl.u32 %v743, 16
    %v746 = vcvt.s32.f32 %v744
    %v747 = vcvt.s32.f32 %v745
    %748 = vadd.xlane.f32.xlu0 %v746
    %v749 = vpop.xlane.xlu0 %748
    %750 = vadd.xlane.f32.xlu0 %v747
    %v751 = vpop.xlane.xlu0 %750
    %v752 = vcvt.f32.s32 %v749
    %v753 = vcvt.f32.s32 %v751
    %v754 = vshll.u32 %v753, 16
    %v755 = vadd.s32 %v754, %v752
    %v756 = vadd.s32 %v463, %v464
    %v757 = vadd.s32 %v756, %v465
    %v758 = vadd.s32 %v757, %v466
    %v759 = vand.u32 %v758, 65535
    %v760 = vshrl.u32 %v758, 16
    %v761 = vcvt.s32.f32 %v759
    %v762 = vcvt.s32.f32 %v760
    %763 = vadd.xlane.f32.xlu0 %v761
    %v764 = vpop.xlane.xlu0 %763
    %765 = vadd.xlane.f32.xlu0 %v762
    %v766 = vpop.xlane.xlu0 %765
    %v767 = vcvt.f32.s32 %v764
    %v768 = vcvt.f32.s32 %v766
    %v769 = vshll.u32 %v768, 16
    %v770 = vadd.s32 %v769, %v767
    %v771 = vadd.s32 %v467, %v468
    %v772 = vadd.s32 %v771, %v469
    %v773 = vadd.s32 %v772, %v470
    %v774 = vand.u32 %v773, 65535
    %v775 = vshrl.u32 %v773, 16
    %v776 = vcvt.s32.f32 %v774
    %v777 = vcvt.s32.f32 %v775
    %778 = vadd.xlane.f32.xlu0 %v776
    %v779 = vpop.xlane.xlu0 %778
    %780 = vadd.xlane.f32.xlu0 %v777
    %v781 = vpop.xlane.xlu0 %780
    %v782 = vcvt.f32.s32 %v779
    %v783 = vcvt.f32.s32 %v781
    %v784 = vshll.u32 %v783, 16
    %v785 = vadd.s32 %v784, %v782
    %v786 = vadd.s32 %v471, %v472
    %v787 = vadd.s32 %v786, %v473
    %v788 = vadd.s32 %v787, %v474
    %v789 = vand.u32 %v788, 65535
    %v790 = vshrl.u32 %v788, 16
    %v791 = vcvt.s32.f32 %v789
    %v792 = vcvt.s32.f32 %v790
    %793 = vadd.xlane.f32.xlu0 %v791
    %v794 = vpop.xlane.xlu0 %793
    %795 = vadd.xlane.f32.xlu0 %v792
    %v796 = vpop.xlane.xlu0 %795
    %v797 = vcvt.f32.s32 %v794
    %v798 = vcvt.f32.s32 %v796
    %v799 = vshll.u32 %v798, 16
    %v800 = vadd.s32 %v799, %v797
    %v801 = vadd.s32 %v475, %v476
    %v802 = vadd.s32 %v801, %v477
    %v803 = vadd.s32 %v802, %v478
    %v804 = vand.u32 %v803, 65535
    %v805 = vshrl.u32 %v803, 16
    %v806 = vcvt.s32.f32 %v804
    %v807 = vcvt.s32.f32 %v805
    %808 = vadd.xlane.f32.xlu0 %v806
    %v809 = vpop.xlane.xlu0 %808
    %810 = vadd.xlane.f32.xlu0 %v807
    %v811 = vpop.xlane.xlu0 %810
    %v812 = vcvt.f32.s32 %v809
    %v813 = vcvt.f32.s32 %v811
    %v814 = vshll.u32 %v813, 16
    %v815 = vadd.s32 %v814, %v812
    %v816 = vadd.s32 %v479, %v480
    %v817 = vadd.s32 %v816, %v481
    %v818 = vadd.s32 %v817, %v482
    %v819 = vand.u32 %v818, 65535
    %v820 = vshrl.u32 %v818, 16
    %v821 = vcvt.s32.f32 %v819
    %v822 = vcvt.s32.f32 %v820
    %823 = vadd.xlane.f32.xlu0 %v821
    %v824 = vpop.xlane.xlu0 %823
    %825 = vadd.xlane.f32.xlu0 %v822
    %v826 = vpop.xlane.xlu0 %825
    %v827 = vcvt.f32.s32 %v824
    %v828 = vcvt.f32.s32 %v826
    %v829 = vshll.u32 %v828, 16
    %v830 = vadd.s32 %v829, %v827
    %v831 = vadd.s32 %v483, %v484
    %v832 = vadd.s32 %v831, %v485
    %v833 = vadd.s32 %v832, %v486
    %v834 = vand.u32 %v833, 65535
    %v835 = vshrl.u32 %v833, 16
    %v836 = vcvt.s32.f32 %v834
    %v837 = vcvt.s32.f32 %v835
    %838 = vadd.xlane.f32.xlu0 %v836
    %v839 = vpop.xlane.xlu0 %838
    %840 = vadd.xlane.f32.xlu0 %v837
    %v841 = vpop.xlane.xlu0 %840
    %v842 = vcvt.f32.s32 %v839
    %v843 = vcvt.f32.s32 %v841
    %v844 = vshll.u32 %v843, 16
    %v845 = vadd.s32 %v844, %v842
    %v846 = vadd.s32 %v487, %v488
    %v847 = vadd.s32 %v846, %v489
    %v848 = vadd.s32 %v847, %v490
    %v849 = vand.u32 %v848, 65535
    %v850 = vshrl.u32 %v848, 16
    %v851 = vcvt.s32.f32 %v849
    %v852 = vcvt.s32.f32 %v850
    %853 = vadd.xlane.f32.xlu0 %v851
    %v854 = vpop.xlane.xlu0 %853
    %855 = vadd.xlane.f32.xlu0 %v852
    %v856 = vpop.xlane.xlu0 %855
    %v857 = vcvt.f32.s32 %v854
    %v858 = vcvt.f32.s32 %v856
    %v859 = vshll.u32 %v858, 16
    %v860 = vadd.s32 %v859, %v857
    %v861 = vadd.s32 %v491, %v492
    %v862 = vadd.s32 %v861, %v493
    %v863 = vadd.s32 %v862, %v494
    %v864 = vand.u32 %v863, 65535
    %v865 = vshrl.u32 %v863, 16
    %v866 = vcvt.s32.f32 %v864
    %v867 = vcvt.s32.f32 %v865
    %868 = vadd.xlane.f32.xlu0 %v866
    %v869 = vpop.xlane.xlu0 %868
    %870 = vadd.xlane.f32.xlu0 %v867
    %v871 = vpop.xlane.xlu0 %870
    %v872 = vcvt.f32.s32 %v869
    %v873 = vcvt.f32.s32 %v871
    %v874 = vshll.u32 %v873, 16
    %v875 = vadd.s32 %v874, %v872
    %v876 = vadd.s32 %v495, %v496
    %v877 = vadd.s32 %v876, %v497
    %v878 = vadd.s32 %v877, %v498
    %v879 = vand.u32 %v878, 65535
    %v880 = vshrl.u32 %v878, 16
    %v881 = vcvt.s32.f32 %v879
    %v882 = vcvt.s32.f32 %v880
    %883 = vadd.xlane.f32.xlu0 %v881
    %v884 = vpop.xlane.xlu0 %883
    %885 = vadd.xlane.f32.xlu0 %v882
    %v886 = vpop.xlane.xlu0 %885
    %v887 = vcvt.f32.s32 %v884
    %v888 = vcvt.f32.s32 %v886
    %v889 = vshll.u32 %v888, 16
    %v890 = vadd.s32 %v889, %v887
    %v891 = vadd.s32 %v499, %v500
    %v892 = vadd.s32 %v891, %v501
    %v893 = vadd.s32 %v892, %v502
    %v894 = vand.u32 %v893, 65535
    %v895 = vshrl.u32 %v893, 16
    %v896 = vcvt.s32.f32 %v894
    %v897 = vcvt.s32.f32 %v895
    %898 = vadd.xlane.f32.xlu0 %v896
    %v899 = vpop.xlane.xlu0 %898
    %900 = vadd.xlane.f32.xlu0 %v897
    %v901 = vpop.xlane.xlu0 %900
    %v902 = vcvt.f32.s32 %v899
    %v903 = vcvt.f32.s32 %v901
    %v904 = vshll.u32 %v903, 16
    %v905 = vadd.s32 %v904, %v902
    %v906 = vadd.s32 %v503, %v504
    %v907 = vadd.s32 %v906, %v505
    %v908 = vadd.s32 %v907, %v506
    %v909 = vand.u32 %v908, 65535
    %v910 = vshrl.u32 %v908, 16
    %v911 = vcvt.s32.f32 %v909
    %v912 = vcvt.s32.f32 %v910
    %913 = vadd.xlane.f32.xlu0 %v911
    %v914 = vpop.xlane.xlu0 %913
    %915 = vadd.xlane.f32.xlu0 %v912
    %v916 = vpop.xlane.xlu0 %915
    %v917 = vcvt.f32.s32 %v914
    %v918 = vcvt.f32.s32 %v916
    %v919 = vshll.u32 %v918, 16
    %v920 = vadd.s32 %v919, %v917
    %v921 = vadd.s32 %v507, %v508
    %v922 = vadd.s32 %v921, %v509
    %v923 = vadd.s32 %v922, %v510
    %v924 = vand.u32 %v923, 65535
    %v925 = vshrl.u32 %v923, 16
    %v926 = vcvt.s32.f32 %v924
    %v927 = vcvt.s32.f32 %v925
    %928 = vadd.xlane.f32.xlu0 %v926
    %v929 = vpop.xlane.xlu0 %928
    %930 = vadd.xlane.f32.xlu0 %v927
    %v931 = vpop.xlane.xlu0 %930
    %v932 = vcvt.f32.s32 %v929
    %v933 = vcvt.f32.s32 %v931
    %v934 = vshll.u32 %v933, 16
    %v935 = vadd.s32 %v934, %v932
    %v936 = vadd.s32 %v511, %v512
    %v937 = vadd.s32 %v936, %v513
    %v938 = vadd.s32 %v937, %v514
    %v939 = vand.u32 %v938, 65535
    %v940 = vshrl.u32 %v938, 16
    %v941 = vcvt.s32.f32 %v939
    %v942 = vcvt.s32.f32 %v940
    %943 = vadd.xlane.f32.xlu0 %v941
    %v944 = vpop.xlane.xlu0 %943
    %945 = vadd.xlane.f32.xlu0 %v942
    %v946 = vpop.xlane.xlu0 %945
    %v947 = vcvt.f32.s32 %v944
    %v948 = vcvt.f32.s32 %v946
    %v949 = vshll.u32 %v948, 16
    %v950 = vadd.s32 %v949, %v947
    %v951 = vadd.s32 %v515, %v516
    %v952 = vadd.s32 %v951, %v517
    %v953 = vadd.s32 %v952, %v518
    %v954 = vand.u32 %v953, 65535
    %v955 = vshrl.u32 %v953, 16
    %v956 = vcvt.s32.f32 %v954
    %v957 = vcvt.s32.f32 %v955
    %958 = vadd.xlane.f32.xlu0 %v956
    %v959 = vpop.xlane.xlu0 %958
    %960 = vadd.xlane.f32.xlu0 %v957
    %v961 = vpop.xlane.xlu0 %960
    %v962 = vcvt.f32.s32 %v959
    %v963 = vcvt.f32.s32 %v961
    %v964 = vshll.u32 %v963, 16
    %v965 = vadd.s32 %v964, %v962
    %v966 = vadd.s32 %v519, %v520
    %v967 = vadd.s32 %v966, %v521
    %v968 = vadd.s32 %v967, %v522
    %v969 = vand.u32 %v968, 65535
    %v970 = vshrl.u32 %v968, 16
    %v971 = vcvt.s32.f32 %v969
    %v972 = vcvt.s32.f32 %v970
    %973 = vadd.xlane.f32.xlu0 %v971
    %v974 = vpop.xlane.xlu0 %973
    %975 = vadd.xlane.f32.xlu0 %v972
    %v976 = vpop.xlane.xlu0 %975
    %v977 = vcvt.f32.s32 %v974
    %v978 = vcvt.f32.s32 %v976
    %v979 = vshll.u32 %v978, 16
    %v980 = vadd.s32 %v979, %v977
    %v981 = vadd.s32 %v523, %v524
    %v982 = vadd.s32 %v981, %v525
    %v983 = vadd.s32 %v982, %v526
    %v984 = vand.u32 %v983, 65535
    %v985 = vshrl.u32 %v983, 16
    %v986 = vcvt.s32.f32 %v984
    %v987 = vcvt.s32.f32 %v985
    %988 = vadd.xlane.f32.xlu0 %v986
    %v989 = vpop.xlane.xlu0 %988
    %990 = vadd.xlane.f32.xlu0 %v987
    %v991 = vpop.xlane.xlu0 %990
    %v992 = vcvt.f32.s32 %v989
    %v993 = vcvt.f32.s32 %v991
    %v994 = vshll.u32 %v993, 16
    %v995 = vadd.s32 %v994, %v992
    %v996 = vadd.s32 %v527, %v528
    %v997 = vadd.s32 %v996, %v529
    %v998 = vadd.s32 %v997, %v530
    %v999 = vand.u32 %v998, 65535
    %v1000 = vshrl.u32 %v998, 16
    %v1001 = vcvt.s32.f32 %v999
    %v1002 = vcvt.s32.f32 %v1000
    %1003 = vadd.xlane.f32.xlu0 %v1001
    %v1004 = vpop.xlane.xlu0 %1003
    %1005 = vadd.xlane.f32.xlu0 %v1002
    %v1006 = vpop.xlane.xlu0 %1005
    %v1007 = vcvt.f32.s32 %v1004
    %v1008 = vcvt.f32.s32 %v1006
    %v1009 = vshll.u32 %v1008, 16
    %v1010 = vadd.s32 %v1009, %v1007
    %v1011 = vadd.s32 %v60, %v545
    %v1012 = vadd.s32 %v61, %v560
    %v1013 = vadd.s32 %v62, %v575
    %v1014 = vadd.s32 %v63, %v590
    %v1015 = vadd.s32 %v64, %v605
    %v1016 = vadd.s32 %v65, %v620
    %v1017 = vadd.s32 %v66, %v635
    %v1018 = vadd.s32 %v67, %v650
    %v1019 = vadd.s32 %v68, %v665
    %v1020 = vadd.s32 %v69, %v680
    %v1021 = vadd.s32 %v70, %v695
    %v1022 = vadd.s32 %v71, %v710
    %v1023 = vadd.s32 %v72, %v725
    %v1024 = vadd.s32 %v73, %v740
    %v1025 = vadd.s32 %v74, %v755
    %v1026 = vadd.s32 %v75, %v770
    %v1027 = vadd.s32 %v76, %v785
    %v1028 = vadd.s32 %v77, %v800
    %v1029 = vadd.s32 %v78, %v815
    %v1030 = vadd.s32 %v79, %v830
    %v1031 = vadd.s32 %v80, %v845
    %v1032 = vadd.s32 %v81, %v860
    %v1033 = vadd.s32 %v82, %v875
    %v1034 = vadd.s32 %v83, %v890
    %v1035 = vadd.s32 %v84, %v905
    %v1036 = vadd.s32 %v85, %v920
    %v1037 = vadd.s32 %v86, %v935
    %v1038 = vadd.s32 %v87, %v950
    %v1039 = vadd.s32 %v88, %v965
    %v1040 = vadd.s32 %v89, %v980
    %v1041 = vadd.s32 %v90, %v995
    %v1042 = vadd.s32 %v91, %v1010
    %v1043 = vlaneseq
    %v1044 = vshrl.u32 %v1043, 7
    %v1045 = vsub.s32 0, %v1044
    %v1046 = vrot.slane %v128, %v1045
    %v1047 = vlaneseq
    %v1048 = vshrl.u32 %v1047, 7
    %v1049 = vsub.s32 1, %v1048
    %v1050 = vrot.slane %v128, %v1049
    %v1051 = vlaneseq
    %v1052 = vshrl.u32 %v1051, 7
    %v1053 = vsub.s32 2, %v1052
    %v1054 = vrot.slane %v128, %v1053
    %v1055 = vlaneseq
    %v1056 = vshrl.u32 %v1055, 7
    %v1057 = vsub.s32 3, %v1056
    %v1058 = vrot.slane %v128, %v1057
    %v1059 = vsel %vm259, %v1046, 0
    %v1060 = vsel %vm260, %v1050, 0
    %v1061 = vsel %vm261, %v1054, 0
    %v1062 = vsel %vm262, %v1058, 0
    %v1063 = vsel %vm263, %v1046, 0
    %v1064 = vsel %vm264, %v1050, 0
    %v1065 = vsel %vm265, %v1054, 0
    %v1066 = vsel %vm266, %v1058, 0
    %v1067 = vsel %vm267, %v1046, 0
    %v1068 = vsel %vm268, %v1050, 0
    %v1069 = vsel %vm269, %v1054, 0
    %v1070 = vsel %vm270, %v1058, 0
    %v1071 = vsel %vm271, %v1046, 0
    %v1072 = vsel %vm272, %v1050, 0
    %v1073 = vsel %vm273, %v1054, 0
    %v1074 = vsel %vm274, %v1058, 0
    %v1075 = vsel %vm275, %v1046, 0
    %v1076 = vsel %vm276, %v1050, 0
    %v1077 = vsel %vm277, %v1054, 0
    %v1078 = vsel %vm278, %v1058, 0
    %v1079 = vsel %vm279, %v1046, 0
    %v1080 = vsel %vm280, %v1050, 0
    %v1081 = vsel %vm281, %v1054, 0
    %v1082 = vsel %vm282, %v1058, 0
    %v1083 = vsel %vm283, %v1046, 0
    %v1084 = vsel %vm284, %v1050, 0
    %v1085 = vsel %vm285, %v1054, 0
    %v1086 = vsel %vm286, %v1058, 0
    %v1087 = vsel %vm287, %v1046, 0
    %v1088 = vsel %vm288, %v1050, 0
    %v1089 = vsel %vm289, %v1054, 0
    %v1090 = vsel %vm290, %v1058, 0
    %v1091 = vsel %vm291, %v1046, 0
    %v1092 = vsel %vm292, %v1050, 0
    %v1093 = vsel %vm293, %v1054, 0
    %v1094 = vsel %vm294, %v1058, 0
    %v1095 = vsel %vm295, %v1046, 0
    %v1096 = vsel %vm296, %v1050, 0
    %v1097 = vsel %vm297, %v1054, 0
    %v1098 = vsel %vm298, %v1058, 0
    %v1099 = vsel %vm299, %v1046, 0
    %v1100 = vsel %vm300, %v1050, 0
    %v1101 = vsel %vm301, %v1054, 0
    %v1102 = vsel %vm302, %v1058, 0
    %v1103 = vsel %vm303, %v1046, 0
    %v1104 = vsel %vm304, %v1050, 0
    %v1105 = vsel %vm305, %v1054, 0
    %v1106 = vsel %vm306, %v1058, 0
    %v1107 = vsel %vm307, %v1046, 0
    %v1108 = vsel %vm308, %v1050, 0
    %v1109 = vsel %vm309, %v1054, 0
    %v1110 = vsel %vm310, %v1058, 0
    %v1111 = vsel %vm311, %v1046, 0
    %v1112 = vsel %vm312, %v1050, 0
    %v1113 = vsel %vm313, %v1054, 0
    %v1114 = vsel %vm314, %v1058, 0
    %v1115 = vsel %vm315, %v1046, 0
    %v1116 = vsel %vm316, %v1050, 0
    %v1117 = vsel %vm317, %v1054, 0
    %v1118 = vsel %vm318, %v1058, 0
    %v1119 = vsel %vm319, %v1046, 0
    %v1120 = vsel %vm320, %v1050, 0
    %v1121 = vsel %vm321, %v1054, 0
    %v1122 = vsel %vm322, %v1058, 0
    %v1123 = vsel %vm323, %v1046, 0
    %v1124 = vsel %vm324, %v1050, 0
    %v1125 = vsel %vm325, %v1054, 0
    %v1126 = vsel %vm326, %v1058, 0
    %v1127 = vsel %vm327, %v1046, 0
    %v1128 = vsel %vm328, %v1050, 0
    %v1129 = vsel %vm329, %v1054, 0
    %v1130 = vsel %vm330, %v1058, 0
    %v1131 = vsel %vm331, %v1046, 0
    %v1132 = vsel %vm332, %v1050, 0
    %v1133 = vsel %vm333, %v1054, 0
    %v1134 = vsel %vm334, %v1058, 0
    %v1135 = vsel %vm335, %v1046, 0
    %v1136 = vsel %vm336, %v1050, 0
    %v1137 = vsel %vm337, %v1054, 0
    %v1138 = vsel %vm338, %v1058, 0
    %v1139 = vsel %vm339, %v1046, 0
    %v1140 = vsel %vm340, %v1050, 0
    %v1141 = vsel %vm341, %v1054, 0
    %v1142 = vsel %vm342, %v1058, 0
    %v1143 = vsel %vm343, %v1046, 0
    %v1144 = vsel %vm344, %v1050, 0
    %v1145 = vsel %vm345, %v1054, 0
    %v1146 = vsel %vm346, %v1058, 0
    %v1147 = vsel %vm347, %v1046, 0
    %v1148 = vsel %vm348, %v1050, 0
    %v1149 = vsel %vm349, %v1054, 0
    %v1150 = vsel %vm350, %v1058, 0
    %v1151 = vsel %vm351, %v1046, 0
    %v1152 = vsel %vm352, %v1050, 0
    %v1153 = vsel %vm353, %v1054, 0
    %v1154 = vsel %vm354, %v1058, 0
    %v1155 = vsel %vm355, %v1046, 0
    %v1156 = vsel %vm356, %v1050, 0
    %v1157 = vsel %vm357, %v1054, 0
    %v1158 = vsel %vm358, %v1058, 0
    %v1159 = vsel %vm359, %v1046, 0
    %v1160 = vsel %vm360, %v1050, 0
    %v1161 = vsel %vm361, %v1054, 0
    %v1162 = vsel %vm362, %v1058, 0
    %v1163 = vsel %vm363, %v1046, 0
    %v1164 = vsel %vm364, %v1050, 0
    %v1165 = vsel %vm365, %v1054, 0
    %v1166 = vsel %vm366, %v1058, 0
    %v1167 = vsel %vm367, %v1046, 0
    %v1168 = vsel %vm368, %v1050, 0
    %v1169 = vsel %vm369, %v1054, 0
    %v1170 = vsel %vm370, %v1058, 0
    %v1171 = vsel %vm371, %v1046, 0
    %v1172 = vsel %vm372, %v1050, 0
    %v1173 = vsel %vm373, %v1054, 0
    %v1174 = vsel %vm374, %v1058, 0
    %v1175 = vsel %vm375, %v1046, 0
    %v1176 = vsel %vm376, %v1050, 0
    %v1177 = vsel %vm377, %v1054, 0
    %v1178 = vsel %vm378, %v1058, 0
    %v1179 = vsel %vm379, %v1046, 0
    %v1180 = vsel %vm380, %v1050, 0
    %v1181 = vsel %vm381, %v1054, 0
    %v1182 = vsel %vm382, %v1058, 0
    %v1183 = vsel %vm383, %v1046, 0
    %v1184 = vsel %vm384, %v1050, 0
    %v1185 = vsel %vm385, %v1054, 0
    %v1186 = vsel %vm386, %v1058, 0
    %v1187 = vadd.s32 %v1059, %v1060
    %v1188 = vadd.s32 %v1187, %v1061
    %v1189 = vadd.s32 %v1188, %v1062
    %v1190 = vand.u32 %v1189, 65535
    %v1191 = vshrl.u32 %v1189, 16
    %v1192 = vcvt.s32.f32 %v1190
    %v1193 = vcvt.s32.f32 %v1191
    %1194 = vadd.xlane.f32.xlu0 %v1192
    %v1195 = vpop.xlane.xlu0 %1194
    %1196 = vadd.xlane.f32.xlu0 %v1193
    %v1197 = vpop.xlane.xlu0 %1196
    %v1198 = vcvt.f32.s32 %v1195
    %v1199 = vcvt.f32.s32 %v1197
    %v1200 = vshll.u32 %v1199, 16
    %v1201 = vadd.s32 %v1200, %v1198
    %v1202 = vadd.s32 %v1063, %v1064
    %v1203 = vadd.s32 %v1202, %v1065
    %v1204 = vadd.s32 %v1203, %v1066
    %v1205 = vand.u32 %v1204, 65535
    %v1206 = vshrl.u32 %v1204, 16
    %v1207 = vcvt.s32.f32 %v1205
    %v1208 = vcvt.s32.f32 %v1206
    %1209 = vadd.xlane.f32.xlu0 %v1207
    %v1210 = vpop.xlane.xlu0 %1209
    %1211 = vadd.xlane.f32.xlu0 %v1208
    %v1212 = vpop.xlane.xlu0 %1211
    %v1213 = vcvt.f32.s32 %v1210
    %v1214 = vcvt.f32.s32 %v1212
    %v1215 = vshll.u32 %v1214, 16
    %v1216 = vadd.s32 %v1215, %v1213
    %v1217 = vadd.s32 %v1067, %v1068
    %v1218 = vadd.s32 %v1217, %v1069
    %v1219 = vadd.s32 %v1218, %v1070
    %v1220 = vand.u32 %v1219, 65535
    %v1221 = vshrl.u32 %v1219, 16
    %v1222 = vcvt.s32.f32 %v1220
    %v1223 = vcvt.s32.f32 %v1221
    %1224 = vadd.xlane.f32.xlu0 %v1222
    %v1225 = vpop.xlane.xlu0 %1224
    %1226 = vadd.xlane.f32.xlu0 %v1223
    %v1227 = vpop.xlane.xlu0 %1226
    %v1228 = vcvt.f32.s32 %v1225
    %v1229 = vcvt.f32.s32 %v1227
    %v1230 = vshll.u32 %v1229, 16
    %v1231 = vadd.s32 %v1230, %v1228
    %v1232 = vadd.s32 %v1071, %v1072
    %v1233 = vadd.s32 %v1232, %v1073
    %v1234 = vadd.s32 %v1233, %v1074
    %v1235 = vand.u32 %v1234, 65535
    %v1236 = vshrl.u32 %v1234, 16
    %v1237 = vcvt.s32.f32 %v1235
    %v1238 = vcvt.s32.f32 %v1236
    %1239 = vadd.xlane.f32.xlu0 %v1237
    %v1240 = vpop.xlane.xlu0 %1239
    %1241 = vadd.xlane.f32.xlu0 %v1238
    %v1242 = vpop.xlane.xlu0 %1241
    %v1243 = vcvt.f32.s32 %v1240
    %v1244 = vcvt.f32.s32 %v1242
    %v1245 = vshll.u32 %v1244, 16
    %v1246 = vadd.s32 %v1245, %v1243
    %v1247 = vadd.s32 %v1075, %v1076
    %v1248 = vadd.s32 %v1247, %v1077
    %v1249 = vadd.s32 %v1248, %v1078
    %v1250 = vand.u32 %v1249, 65535
    %v1251 = vshrl.u32 %v1249, 16
    %v1252 = vcvt.s32.f32 %v1250
    %v1253 = vcvt.s32.f32 %v1251
    %1254 = vadd.xlane.f32.xlu0 %v1252
    %v1255 = vpop.xlane.xlu0 %1254
    %1256 = vadd.xlane.f32.xlu0 %v1253
    %v1257 = vpop.xlane.xlu0 %1256
    %v1258 = vcvt.f32.s32 %v1255
    %v1259 = vcvt.f32.s32 %v1257
    %v1260 = vshll.u32 %v1259, 16
    %v1261 = vadd.s32 %v1260, %v1258
    %v1262 = vadd.s32 %v1079, %v1080
    %v1263 = vadd.s32 %v1262, %v1081
    %v1264 = vadd.s32 %v1263, %v1082
    %v1265 = vand.u32 %v1264, 65535
    %v1266 = vshrl.u32 %v1264, 16
    %v1267 = vcvt.s32.f32 %v1265
    %v1268 = vcvt.s32.f32 %v1266
    %1269 = vadd.xlane.f32.xlu0 %v1267
    %v1270 = vpop.xlane.xlu0 %1269
    %1271 = vadd.xlane.f32.xlu0 %v1268
    %v1272 = vpop.xlane.xlu0 %1271
    %v1273 = vcvt.f32.s32 %v1270
    %v1274 = vcvt.f32.s32 %v1272
    %v1275 = vshll.u32 %v1274, 16
    %v1276 = vadd.s32 %v1275, %v1273
    %v1277 = vadd.s32 %v1083, %v1084
    %v1278 = vadd.s32 %v1277, %v1085
    %v1279 = vadd.s32 %v1278, %v1086
    %v1280 = vand.u32 %v1279, 65535
    %v1281 = vshrl.u32 %v1279, 16
    %v1282 = vcvt.s32.f32 %v1280
    %v1283 = vcvt.s32.f32 %v1281
    %1284 = vadd.xlane.f32.xlu0 %v1282
    %v1285 = vpop.xlane.xlu0 %1284
    %1286 = vadd.xlane.f32.xlu0 %v1283
    %v1287 = vpop.xlane.xlu0 %1286
    %v1288 = vcvt.f32.s32 %v1285
    %v1289 = vcvt.f32.s32 %v1287
    %v1290 = vshll.u32 %v1289, 16
    %v1291 = vadd.s32 %v1290, %v1288
    %v1292 = vadd.s32 %v1087, %v1088
    %v1293 = vadd.s32 %v1292, %v1089
    %v1294 = vadd.s32 %v1293, %v1090
    %v1295 = vand.u32 %v1294, 65535
    %v1296 = vshrl.u32 %v1294, 16
    %v1297 = vcvt.s32.f32 %v1295
    %v1298 = vcvt.s32.f32 %v1296
    %1299 = vadd.xlane.f32.xlu0 %v1297
    %v1300 = vpop.xlane.xlu0 %1299
    %1301 = vadd.xlane.f32.xlu0 %v1298
    %v1302 = vpop.xlane.xlu0 %1301
    %v1303 = vcvt.f32.s32 %v1300
    %v1304 = vcvt.f32.s32 %v1302
    %v1305 = vshll.u32 %v1304, 16
    %v1306 = vadd.s32 %v1305, %v1303
    %v1307 = vadd.s32 %v1091, %v1092
    %v1308 = vadd.s32 %v1307, %v1093
    %v1309 = vadd.s32 %v1308, %v1094
    %v1310 = vand.u32 %v1309, 65535
    %v1311 = vshrl.u32 %v1309, 16
    %v1312 = vcvt.s32.f32 %v1310
    %v1313 = vcvt.s32.f32 %v1311
    %1314 = vadd.xlane.f32.xlu0 %v1312
    %v1315 = vpop.xlane.xlu0 %1314
    %1316 = vadd.xlane.f32.xlu0 %v1313
    %v1317 = vpop.xlane.xlu0 %1316
    %v1318 = vcvt.f32.s32 %v1315
    %v1319 = vcvt.f32.s32 %v1317
    %v1320 = vshll.u32 %v1319, 16
    %v1321 = vadd.s32 %v1320, %v1318
    %v1322 = vadd.s32 %v1095, %v1096
    %v1323 = vadd.s32 %v1322, %v1097
    %v1324 = vadd.s32 %v1323, %v1098
    %v1325 = vand.u32 %v1324, 65535
    %v1326 = vshrl.u32 %v1324, 16
    %v1327 = vcvt.s32.f32 %v1325
    %v1328 = vcvt.s32.f32 %v1326
    %1329 = vadd.xlane.f32.xlu0 %v1327
    %v1330 = vpop.xlane.xlu0 %1329
    %1331 = vadd.xlane.f32.xlu0 %v1328
    %v1332 = vpop.xlane.xlu0 %1331
    %v1333 = vcvt.f32.s32 %v1330
    %v1334 = vcvt.f32.s32 %v1332
    %v1335 = vshll.u32 %v1334, 16
    %v1336 = vadd.s32 %v1335, %v1333
    %v1337 = vadd.s32 %v1099, %v1100
    %v1338 = vadd.s32 %v1337, %v1101
    %v1339 = vadd.s32 %v1338, %v1102
    %v1340 = vand.u32 %v1339, 65535
    %v1341 = vshrl.u32 %v1339, 16
    %v1342 = vcvt.s32.f32 %v1340
    %v1343 = vcvt.s32.f32 %v1341
    %1344 = vadd.xlane.f32.xlu0 %v1342
    %v1345 = vpop.xlane.xlu0 %1344
    %1346 = vadd.xlane.f32.xlu0 %v1343
    %v1347 = vpop.xlane.xlu0 %1346
    %v1348 = vcvt.f32.s32 %v1345
    %v1349 = vcvt.f32.s32 %v1347
    %v1350 = vshll.u32 %v1349, 16
    %v1351 = vadd.s32 %v1350, %v1348
    %v1352 = vadd.s32 %v1103, %v1104
    %v1353 = vadd.s32 %v1352, %v1105
    %v1354 = vadd.s32 %v1353, %v1106
    %v1355 = vand.u32 %v1354, 65535
    %v1356 = vshrl.u32 %v1354, 16
    %v1357 = vcvt.s32.f32 %v1355
    %v1358 = vcvt.s32.f32 %v1356
    %1359 = vadd.xlane.f32.xlu0 %v1357
    %v1360 = vpop.xlane.xlu0 %1359
    %1361 = vadd.xlane.f32.xlu0 %v1358
    %v1362 = vpop.xlane.xlu0 %1361
    %v1363 = vcvt.f32.s32 %v1360
    %v1364 = vcvt.f32.s32 %v1362
    %v1365 = vshll.u32 %v1364, 16
    %v1366 = vadd.s32 %v1365, %v1363
    %v1367 = vadd.s32 %v1107, %v1108
    %v1368 = vadd.s32 %v1367, %v1109
    %v1369 = vadd.s32 %v1368, %v1110
    %v1370 = vand.u32 %v1369, 65535
    %v1371 = vshrl.u32 %v1369, 16
    %v1372 = vcvt.s32.f32 %v1370
    %v1373 = vcvt.s32.f32 %v1371
    %1374 = vadd.xlane.f32.xlu0 %v1372
    %v1375 = vpop.xlane.xlu0 %1374
    %1376 = vadd.xlane.f32.xlu0 %v1373
    %v1377 = vpop.xlane.xlu0 %1376
    %v1378 = vcvt.f32.s32 %v1375
    %v1379 = vcvt.f32.s32 %v1377
    %v1380 = vshll.u32 %v1379, 16
    %v1381 = vadd.s32 %v1380, %v1378
    %v1382 = vadd.s32 %v1111, %v1112
    %v1383 = vadd.s32 %v1382, %v1113
    %v1384 = vadd.s32 %v1383, %v1114
    %v1385 = vand.u32 %v1384, 65535
    %v1386 = vshrl.u32 %v1384, 16
    %v1387 = vcvt.s32.f32 %v1385
    %v1388 = vcvt.s32.f32 %v1386
    %1389 = vadd.xlane.f32.xlu0 %v1387
    %v1390 = vpop.xlane.xlu0 %1389
    %1391 = vadd.xlane.f32.xlu0 %v1388
    %v1392 = vpop.xlane.xlu0 %1391
    %v1393 = vcvt.f32.s32 %v1390
    %v1394 = vcvt.f32.s32 %v1392
    %v1395 = vshll.u32 %v1394, 16
    %v1396 = vadd.s32 %v1395, %v1393
    %v1397 = vadd.s32 %v1115, %v1116
    %v1398 = vadd.s32 %v1397, %v1117
    %v1399 = vadd.s32 %v1398, %v1118
    %v1400 = vand.u32 %v1399, 65535
    %v1401 = vshrl.u32 %v1399, 16
    %v1402 = vcvt.s32.f32 %v1400
    %v1403 = vcvt.s32.f32 %v1401
    %1404 = vadd.xlane.f32.xlu0 %v1402
    %v1405 = vpop.xlane.xlu0 %1404
    %1406 = vadd.xlane.f32.xlu0 %v1403
    %v1407 = vpop.xlane.xlu0 %1406
    %v1408 = vcvt.f32.s32 %v1405
    %v1409 = vcvt.f32.s32 %v1407
    %v1410 = vshll.u32 %v1409, 16
    %v1411 = vadd.s32 %v1410, %v1408
    %v1412 = vadd.s32 %v1119, %v1120
    %v1413 = vadd.s32 %v1412, %v1121
    %v1414 = vadd.s32 %v1413, %v1122
    %v1415 = vand.u32 %v1414, 65535
    %v1416 = vshrl.u32 %v1414, 16
    %v1417 = vcvt.s32.f32 %v1415
    %v1418 = vcvt.s32.f32 %v1416
    %1419 = vadd.xlane.f32.xlu0 %v1417
    %v1420 = vpop.xlane.xlu0 %1419
    %1421 = vadd.xlane.f32.xlu0 %v1418
    %v1422 = vpop.xlane.xlu0 %1421
    %v1423 = vcvt.f32.s32 %v1420
    %v1424 = vcvt.f32.s32 %v1422
    %v1425 = vshll.u32 %v1424, 16
    %v1426 = vadd.s32 %v1425, %v1423
    %v1427 = vadd.s32 %v1123, %v1124
    %v1428 = vadd.s32 %v1427, %v1125
    %v1429 = vadd.s32 %v1428, %v1126
    %v1430 = vand.u32 %v1429, 65535
    %v1431 = vshrl.u32 %v1429, 16
    %v1432 = vcvt.s32.f32 %v1430
    %v1433 = vcvt.s32.f32 %v1431
    %1434 = vadd.xlane.f32.xlu0 %v1432
    %v1435 = vpop.xlane.xlu0 %1434
    %1436 = vadd.xlane.f32.xlu0 %v1433
    %v1437 = vpop.xlane.xlu0 %1436
    %v1438 = vcvt.f32.s32 %v1435
    %v1439 = vcvt.f32.s32 %v1437
    %v1440 = vshll.u32 %v1439, 16
    %v1441 = vadd.s32 %v1440, %v1438
    %v1442 = vadd.s32 %v1127, %v1128
    %v1443 = vadd.s32 %v1442, %v1129
    %v1444 = vadd.s32 %v1443, %v1130
    %v1445 = vand.u32 %v1444, 65535
    %v1446 = vshrl.u32 %v1444, 16
    %v1447 = vcvt.s32.f32 %v1445
    %v1448 = vcvt.s32.f32 %v1446
    %1449 = vadd.xlane.f32.xlu0 %v1447
    %v1450 = vpop.xlane.xlu0 %1449
    %1451 = vadd.xlane.f32.xlu0 %v1448
    %v1452 = vpop.xlane.xlu0 %1451
    %v1453 = vcvt.f32.s32 %v1450
    %v1454 = vcvt.f32.s32 %v1452
    %v1455 = vshll.u32 %v1454, 16
    %v1456 = vadd.s32 %v1455, %v1453
    %v1457 = vadd.s32 %v1131, %v1132
    %v1458 = vadd.s32 %v1457, %v1133
    %v1459 = vadd.s32 %v1458, %v1134
    %v1460 = vand.u32 %v1459, 65535
    %v1461 = vshrl.u32 %v1459, 16
    %v1462 = vcvt.s32.f32 %v1460
    %v1463 = vcvt.s32.f32 %v1461
    %1464 = vadd.xlane.f32.xlu0 %v1462
    %v1465 = vpop.xlane.xlu0 %1464
    %1466 = vadd.xlane.f32.xlu0 %v1463
    %v1467 = vpop.xlane.xlu0 %1466
    %v1468 = vcvt.f32.s32 %v1465
    %v1469 = vcvt.f32.s32 %v1467
    %v1470 = vshll.u32 %v1469, 16
    %v1471 = vadd.s32 %v1470, %v1468
    %v1472 = vadd.s32 %v1135, %v1136
    %v1473 = vadd.s32 %v1472, %v1137
    %v1474 = vadd.s32 %v1473, %v1138
    %v1475 = vand.u32 %v1474, 65535
    %v1476 = vshrl.u32 %v1474, 16
    %v1477 = vcvt.s32.f32 %v1475
    %v1478 = vcvt.s32.f32 %v1476
    %1479 = vadd.xlane.f32.xlu0 %v1477
    %v1480 = vpop.xlane.xlu0 %1479
    %1481 = vadd.xlane.f32.xlu0 %v1478
    %v1482 = vpop.xlane.xlu0 %1481
    %v1483 = vcvt.f32.s32 %v1480
    %v1484 = vcvt.f32.s32 %v1482
    %v1485 = vshll.u32 %v1484, 16
    %v1486 = vadd.s32 %v1485, %v1483
    %v1487 = vadd.s32 %v1139, %v1140
    %v1488 = vadd.s32 %v1487, %v1141
    %v1489 = vadd.s32 %v1488, %v1142
    %v1490 = vand.u32 %v1489, 65535
    %v1491 = vshrl.u32 %v1489, 16
    %v1492 = vcvt.s32.f32 %v1490
    %v1493 = vcvt.s32.f32 %v1491
    %1494 = vadd.xlane.f32.xlu0 %v1492
    %v1495 = vpop.xlane.xlu0 %1494
    %1496 = vadd.xlane.f32.xlu0 %v1493
    %v1497 = vpop.xlane.xlu0 %1496
    %v1498 = vcvt.f32.s32 %v1495
    %v1499 = vcvt.f32.s32 %v1497
    %v1500 = vshll.u32 %v1499, 16
    %v1501 = vadd.s32 %v1500, %v1498
    %v1502 = vadd.s32 %v1143, %v1144
    %v1503 = vadd.s32 %v1502, %v1145
    %v1504 = vadd.s32 %v1503, %v1146
    %v1505 = vand.u32 %v1504, 65535
    %v1506 = vshrl.u32 %v1504, 16
    %v1507 = vcvt.s32.f32 %v1505
    %v1508 = vcvt.s32.f32 %v1506
    %1509 = vadd.xlane.f32.xlu0 %v1507
    %v1510 = vpop.xlane.xlu0 %1509
    %1511 = vadd.xlane.f32.xlu0 %v1508
    %v1512 = vpop.xlane.xlu0 %1511
    %v1513 = vcvt.f32.s32 %v1510
    %v1514 = vcvt.f32.s32 %v1512
    %v1515 = vshll.u32 %v1514, 16
    %v1516 = vadd.s32 %v1515, %v1513
    %v1517 = vadd.s32 %v1147, %v1148
    %v1518 = vadd.s32 %v1517, %v1149
    %v1519 = vadd.s32 %v1518, %v1150
    %v1520 = vand.u32 %v1519, 65535
    %v1521 = vshrl.u32 %v1519, 16
    %v1522 = vcvt.s32.f32 %v1520
    %v1523 = vcvt.s32.f32 %v1521
    %1524 = vadd.xlane.f32.xlu0 %v1522
    %v1525 = vpop.xlane.xlu0 %1524
    %1526 = vadd.xlane.f32.xlu0 %v1523
    %v1527 = vpop.xlane.xlu0 %1526
    %v1528 = vcvt.f32.s32 %v1525
    %v1529 = vcvt.f32.s32 %v1527
    %v1530 = vshll.u32 %v1529, 16
    %v1531 = vadd.s32 %v1530, %v1528
    %v1532 = vadd.s32 %v1151, %v1152
    %v1533 = vadd.s32 %v1532, %v1153
    %v1534 = vadd.s32 %v1533, %v1154
    %v1535 = vand.u32 %v1534, 65535
    %v1536 = vshrl.u32 %v1534, 16
    %v1537 = vcvt.s32.f32 %v1535
    %v1538 = vcvt.s32.f32 %v1536
    %1539 = vadd.xlane.f32.xlu0 %v1537
    %v1540 = vpop.xlane.xlu0 %1539
    %1541 = vadd.xlane.f32.xlu0 %v1538
    %v1542 = vpop.xlane.xlu0 %1541
    %v1543 = vcvt.f32.s32 %v1540
    %v1544 = vcvt.f32.s32 %v1542
    %v1545 = vshll.u32 %v1544, 16
    %v1546 = vadd.s32 %v1545, %v1543
    %v1547 = vadd.s32 %v1155, %v1156
    %v1548 = vadd.s32 %v1547, %v1157
    %v1549 = vadd.s32 %v1548, %v1158
    %v1550 = vand.u32 %v1549, 65535
    %v1551 = vshrl.u32 %v1549, 16
    %v1552 = vcvt.s32.f32 %v1550
    %v1553 = vcvt.s32.f32 %v1551
    %1554 = vadd.xlane.f32.xlu0 %v1552
    %v1555 = vpop.xlane.xlu0 %1554
    %1556 = vadd.xlane.f32.xlu0 %v1553
    %v1557 = vpop.xlane.xlu0 %1556
    %v1558 = vcvt.f32.s32 %v1555
    %v1559 = vcvt.f32.s32 %v1557
    %v1560 = vshll.u32 %v1559, 16
    %v1561 = vadd.s32 %v1560, %v1558
    %v1562 = vadd.s32 %v1159, %v1160
    %v1563 = vadd.s32 %v1562, %v1161
    %v1564 = vadd.s32 %v1563, %v1162
    %v1565 = vand.u32 %v1564, 65535
    %v1566 = vshrl.u32 %v1564, 16
    %v1567 = vcvt.s32.f32 %v1565
    %v1568 = vcvt.s32.f32 %v1566
    %1569 = vadd.xlane.f32.xlu0 %v1567
    %v1570 = vpop.xlane.xlu0 %1569
    %1571 = vadd.xlane.f32.xlu0 %v1568
    %v1572 = vpop.xlane.xlu0 %1571
    %v1573 = vcvt.f32.s32 %v1570
    %v1574 = vcvt.f32.s32 %v1572
    %v1575 = vshll.u32 %v1574, 16
    %v1576 = vadd.s32 %v1575, %v1573
    %v1577 = vadd.s32 %v1163, %v1164
    %v1578 = vadd.s32 %v1577, %v1165
    %v1579 = vadd.s32 %v1578, %v1166
    %v1580 = vand.u32 %v1579, 65535
    %v1581 = vshrl.u32 %v1579, 16
    %v1582 = vcvt.s32.f32 %v1580
    %v1583 = vcvt.s32.f32 %v1581
    %1584 = vadd.xlane.f32.xlu0 %v1582
    %v1585 = vpop.xlane.xlu0 %1584
    %1586 = vadd.xlane.f32.xlu0 %v1583
    %v1587 = vpop.xlane.xlu0 %1586
    %v1588 = vcvt.f32.s32 %v1585
    %v1589 = vcvt.f32.s32 %v1587
    %v1590 = vshll.u32 %v1589, 16
    %v1591 = vadd.s32 %v1590, %v1588
    %v1592 = vadd.s32 %v1167, %v1168
    %v1593 = vadd.s32 %v1592, %v1169
    %v1594 = vadd.s32 %v1593, %v1170
    %v1595 = vand.u32 %v1594, 65535
    %v1596 = vshrl.u32 %v1594, 16
    %v1597 = vcvt.s32.f32 %v1595
    %v1598 = vcvt.s32.f32 %v1596
    %1599 = vadd.xlane.f32.xlu0 %v1597
    %v1600 = vpop.xlane.xlu0 %1599
    %1601 = vadd.xlane.f32.xlu0 %v1598
    %v1602 = vpop.xlane.xlu0 %1601
    %v1603 = vcvt.f32.s32 %v1600
    %v1604 = vcvt.f32.s32 %v1602
    %v1605 = vshll.u32 %v1604, 16
    %v1606 = vadd.s32 %v1605, %v1603
    %v1607 = vadd.s32 %v1171, %v1172
    %v1608 = vadd.s32 %v1607, %v1173
    %v1609 = vadd.s32 %v1608, %v1174
    %v1610 = vand.u32 %v1609, 65535
    %v1611 = vshrl.u32 %v1609, 16
    %v1612 = vcvt.s32.f32 %v1610
    %v1613 = vcvt.s32.f32 %v1611
    %1614 = vadd.xlane.f32.xlu0 %v1612
    %v1615 = vpop.xlane.xlu0 %1614
    %1616 = vadd.xlane.f32.xlu0 %v1613
    %v1617 = vpop.xlane.xlu0 %1616
    %v1618 = vcvt.f32.s32 %v1615
    %v1619 = vcvt.f32.s32 %v1617
    %v1620 = vshll.u32 %v1619, 16
    %v1621 = vadd.s32 %v1620, %v1618
    %v1622 = vadd.s32 %v1175, %v1176
    %v1623 = vadd.s32 %v1622, %v1177
    %v1624 = vadd.s32 %v1623, %v1178
    %v1625 = vand.u32 %v1624, 65535
    %v1626 = vshrl.u32 %v1624, 16
    %v1627 = vcvt.s32.f32 %v1625
    %v1628 = vcvt.s32.f32 %v1626
    %1629 = vadd.xlane.f32.xlu0 %v1627
    %v1630 = vpop.xlane.xlu0 %1629
    %1631 = vadd.xlane.f32.xlu0 %v1628
    %v1632 = vpop.xlane.xlu0 %1631
    %v1633 = vcvt.f32.s32 %v1630
    %v1634 = vcvt.f32.s32 %v1632
    %v1635 = vshll.u32 %v1634, 16
    %v1636 = vadd.s32 %v1635, %v1633
    %v1637 = vadd.s32 %v1179, %v1180
    %v1638 = vadd.s32 %v1637, %v1181
    %v1639 = vadd.s32 %v1638, %v1182
    %v1640 = vand.u32 %v1639, 65535
    %v1641 = vshrl.u32 %v1639, 16
    %v1642 = vcvt.s32.f32 %v1640
    %v1643 = vcvt.s32.f32 %v1641
    %1644 = vadd.xlane.f32.xlu0 %v1642
    %v1645 = vpop.xlane.xlu0 %1644
    %1646 = vadd.xlane.f32.xlu0 %v1643
    %v1647 = vpop.xlane.xlu0 %1646
    %v1648 = vcvt.f32.s32 %v1645
    %v1649 = vcvt.f32.s32 %v1647
    %v1650 = vshll.u32 %v1649, 16
    %v1651 = vadd.s32 %v1650, %v1648
    %v1652 = vadd.s32 %v1183, %v1184
    %v1653 = vadd.s32 %v1652, %v1185
    %v1654 = vadd.s32 %v1653, %v1186
    %v1655 = vand.u32 %v1654, 65535
    %v1656 = vshrl.u32 %v1654, 16
    %v1657 = vcvt.s32.f32 %v1655
    %v1658 = vcvt.s32.f32 %v1656
    %1659 = vadd.xlane.f32.xlu0 %v1657
    %v1660 = vpop.xlane.xlu0 %1659
    %1661 = vadd.xlane.f32.xlu0 %v1658
    %v1662 = vpop.xlane.xlu0 %1661
    %v1663 = vcvt.f32.s32 %v1660
    %v1664 = vcvt.f32.s32 %v1662
    %v1665 = vshll.u32 %v1664, 16
    %v1666 = vadd.s32 %v1665, %v1663
    %v1667 = vadd.s32 %v92, %v1201
    %v1668 = vadd.s32 %v93, %v1216
    %v1669 = vadd.s32 %v94, %v1231
    %v1670 = vadd.s32 %v95, %v1246
    %v1671 = vadd.s32 %v96, %v1261
    %v1672 = vadd.s32 %v97, %v1276
    %v1673 = vadd.s32 %v98, %v1291
    %v1674 = vadd.s32 %v99, %v1306
    %v1675 = vadd.s32 %v100, %v1321
    %v1676 = vadd.s32 %v101, %v1336
    %v1677 = vadd.s32 %v102, %v1351
    %v1678 = vadd.s32 %v103, %v1366
    %v1679 = vadd.s32 %v104, %v1381
    %v1680 = vadd.s32 %v105, %v1396
    %v1681 = vadd.s32 %v106, %v1411
    %v1682 = vadd.s32 %v107, %v1426
    %v1683 = vadd.s32 %v108, %v1441
    %v1684 = vadd.s32 %v109, %v1456
    %v1685 = vadd.s32 %v110, %v1471
    %v1686 = vadd.s32 %v111, %v1486
    %v1687 = vadd.s32 %v112, %v1501
    %v1688 = vadd.s32 %v113, %v1516
    %v1689 = vadd.s32 %v114, %v1531
    %v1690 = vadd.s32 %v115, %v1546
    %v1691 = vadd.s32 %v116, %v1561
    %v1692 = vadd.s32 %v117, %v1576
    %v1693 = vadd.s32 %v118, %v1591
    %v1694 = vadd.s32 %v119, %v1606
    %v1695 = vadd.s32 %v120, %v1621
    %v1696 = vadd.s32 %v121, %v1636
    %v1697 = vadd.s32 %v122, %v1651
    %v1698 = vadd.s32 %v123, %v1666
  $region14: #{tpu_custom_call.1} parent=0 // loop_footer
    %s57 = sadd.s32 %s55, 1
  $region15: #{tpu_custom_call.1} parent=0 // loop_footer_branch
    %54 = sbr.rel target = $region11
  $region16: #{tpu_custom_call.1} parent=0 // loop_exit
    _
  %vm1699 = vcmask 7168
  %1700 = vst.msk [vmem:[%s4] sm:$0xff] %vm1699, %v60
  %1701 = vst.msk [vmem:[%s4 + $0x8] sm:$0xff] %vm1699, %v61
  %1702 = vst.msk [vmem:[%s4 + $0x10] sm:$0xff] %vm1699, %v62
  %1703 = vst.msk [vmem:[%s4 + $0x18] sm:$0xff] %vm1699, %v63
  %1704 = vst.msk [vmem:[%s4 + $0x20] sm:$0xff] %vm1699, %v64
  %1705 = vst.msk [vmem:[%s4 + $0x28] sm:$0xff] %vm1699, %v65
  %1706 = vst.msk [vmem:[%s4 + $0x30] sm:$0xff] %vm1699, %v66
  %1707 = vst.msk [vmem:[%s4 + $0x38] sm:$0xff] %vm1699, %v67
  %1708 = vst.msk [vmem:[%s4 + $0x40] sm:$0xff] %vm1699, %v68
  %1709 = vst.msk [vmem:[%s4 + $0x48] sm:$0xff] %vm1699, %v69
  %1710 = vst.msk [vmem:[%s4 + $0x50] sm:$0xff] %vm1699, %v70
  %1711 = vst.msk [vmem:[%s4 + $0x58] sm:$0xff] %vm1699, %v71
  %1712 = vst.msk [vmem:[%s4 + $0x60] sm:$0xff] %vm1699, %v72
  %1713 = vst.msk [vmem:[%s4 + $0x68] sm:$0xff] %vm1699, %v73
  %1714 = vst.msk [vmem:[%s4 + $0x70] sm:$0xff] %vm1699, %v74
  %1715 = vst.msk [vmem:[%s4 + $0x78] sm:$0xff] %vm1699, %v75
  %1716 = vst.msk [vmem:[%s4 + $0x80] sm:$0xff] %vm1699, %v76
  %1717 = vst.msk [vmem:[%s4 + $0x88] sm:$0xff] %vm1699, %v77
  %1718 = vst.msk [vmem:[%s4 + $0x90] sm:$0xff] %vm1699, %v78
  %1719 = vst.msk [vmem:[%s4 + $0x98] sm:$0xff] %vm1699, %v79
  %1720 = vst.msk [vmem:[%s4 + $0xa0] sm:$0xff] %vm1699, %v80
  %1721 = vst.msk [vmem:[%s4 + $0xa8] sm:$0xff] %vm1699, %v81
  %1722 = vst.msk [vmem:[%s4 + $0xb0] sm:$0xff] %vm1699, %v82
  %1723 = vst.msk [vmem:[%s4 + $0xb8] sm:$0xff] %vm1699, %v83
  %1724 = vst.msk [vmem:[%s4 + $0xc0] sm:$0xff] %vm1699, %v84
  %1725 = vst.msk [vmem:[%s4 + $0xc8] sm:$0xff] %vm1699, %v85
  %1726 = vst.msk [vmem:[%s4 + $0xd0] sm:$0xff] %vm1699, %v86
  %1727 = vst.msk [vmem:[%s4 + $0xd8] sm:$0xff] %vm1699, %v87
  %1728 = vst.msk [vmem:[%s4 + $0xe0] sm:$0xff] %vm1699, %v88
  %1729 = vst.msk [vmem:[%s4 + $0xe8] sm:$0xff] %vm1699, %v89
  %1730 = vst.msk [vmem:[%s4 + $0xf0] sm:$0xff] %vm1699, %v90
  %1731 = vst.msk [vmem:[%s4 + $0xf8] sm:$0xff] %vm1699, %v91
  %vm1732 = vcmask 15368
  %1733 = vst.msk [vmem:[%s4] sm:$0xff] %vm1732, %v92
  %1734 = vst.msk [vmem:[%s4 + $0x8] sm:$0xff] %vm1732, %v93
  %1735 = vst.msk [vmem:[%s4 + $0x10] sm:$0xff] %vm1732, %v94
  %1736 = vst.msk [vmem:[%s4 + $0x18] sm:$0xff] %vm1732, %v95
  %1737 = vst.msk [vmem:[%s4 + $0x20] sm:$0xff] %vm1732, %v96
  %1738 = vst.msk [vmem:[%s4 + $0x28] sm:$0xff] %vm1732, %v97
  %1739 = vst.msk [vmem:[%s4 + $0x30] sm:$0xff] %vm1732, %v98
  %1740 = vst.msk [vmem:[%s4 + $0x38] sm:$0xff] %vm1732, %v99
  %1741 = vst.msk [vmem:[%s4 + $0x40] sm:$0xff] %vm1732, %v100
  %1742 = vst.msk [vmem:[%s4 + $0x48] sm:$0xff] %vm1732, %v101
  %1743 = vst.msk [vmem:[%s4 + $0x50] sm:$0xff] %vm1732, %v102
  %1744 = vst.msk [vmem:[%s4 + $0x58] sm:$0xff] %vm1732, %v103
  %1745 = vst.msk [vmem:[%s4 + $0x60] sm:$0xff] %vm1732, %v104
  %1746 = vst.msk [vmem:[%s4 + $0x68] sm:$0xff] %vm1732, %v105
  %1747 = vst.msk [vmem:[%s4 + $0x70] sm:$0xff] %vm1732, %v106
  %1748 = vst.msk [vmem:[%s4 + $0x78] sm:$0xff] %vm1732, %v107
  %1749 = vst.msk [vmem:[%s4 + $0x80] sm:$0xff] %vm1732, %v108
  %1750 = vst.msk [vmem:[%s4 + $0x88] sm:$0xff] %vm1732, %v109
  %1751 = vst.msk [vmem:[%s4 + $0x90] sm:$0xff] %vm1732, %v110
  %1752 = vst.msk [vmem:[%s4 + $0x98] sm:$0xff] %vm1732, %v111
  %1753 = vst.msk [vmem:[%s4 + $0xa0] sm:$0xff] %vm1732, %v112
  %1754 = vst.msk [vmem:[%s4 + $0xa8] sm:$0xff] %vm1732, %v113
  %1755 = vst.msk [vmem:[%s4 + $0xb0] sm:$0xff] %vm1732, %v114
  %1756 = vst.msk [vmem:[%s4 + $0xb8] sm:$0xff] %vm1732, %v115
  %1757 = vst.msk [vmem:[%s4 + $0xc0] sm:$0xff] %vm1732, %v116
  %1758 = vst.msk [vmem:[%s4 + $0xc8] sm:$0xff] %vm1732, %v117
  %1759 = vst.msk [vmem:[%s4 + $0xd0] sm:$0xff] %vm1732, %v118
  %1760 = vst.msk [vmem:[%s4 + $0xd8] sm:$0xff] %vm1732, %v119
  %1761 = vst.msk [vmem:[%s4 + $0xe0] sm:$0xff] %vm1732, %v120
  %1762 = vst.msk [vmem:[%s4 + $0xe8] sm:$0xff] %vm1732, %v121
  %1763 = vst.msk [vmem:[%s4 + $0xf0] sm:$0xff] %vm1732, %v122
  %1764 = vst.msk [vmem:[%s4 + $0xf8] sm:$0xff] %vm1732, %v123
  // Predicated region
  $region17: #{tpu_custom_call.1} parent=0 // pred_check
    _
  $region18: #{tpu_custom_call.1} parent=0 // pred_check_branch
    %1766 = sbr.rel (0) target = $region20
  $region19: #{tpu_custom_call.1} parent=0 // pred_region
    _
  $region20: #{tpu_custom_call.1} parent=0 // pred_fallthru
    _
  // Predicated region
  $region21: #{tpu_custom_call.1} parent=0 // pred_check
    _
  $region22: #{tpu_custom_call.1} parent=0 // pred_check_branch
    %1768 = sbr.rel (0) target = $region24
  $region23: #{tpu_custom_call.1} parent=0 // pred_region
    _
  $region24: #{tpu_custom_call.1} parent=0 // pred_fallthru
    _

</llo_original>
